<compile_context>
chip_gen: v7x
topology: tpu7x:2x2x1
jax: 0.10.0
libtpu: 0.0.40
codegen_flags: <defaults>
</compile_context>

<pallas_src>
import jax
import jax.numpy as jnp
from jax import lax
from jax.experimental import pallas as pl
from jax.experimental.pallas import tpu as pltpu


# ---------------------------------------------------------------------------
# Pallas kernels
# ---------------------------------------------------------------------------
def _conv_relu_pool_kernel(cols_ref, w_ref, pool_ref, o_ref):
    # cols_ref: (1, K, N)  bf16 im2col patches for one batch element
    # w_ref:    (C_out, K) bf16 flattened conv weight, (kh, kw, ci) order
    # pool_ref: (N, Np)    bf16 linear average-pooling operator
    # o_ref:    (1, C_out, Np) f32
    y = jnp.dot(w_ref[...], cols_ref[0], preferred_element_type=jnp.float32)
    y = jnp.maximum(y, 0.0).astype(pool_ref.dtype)           # ReLU, back to bf16 for MXU
    o_ref[0] = jnp.dot(y, pool_ref[...],
                       preferred_element_type=jnp.float32).astype(o_ref.dtype)


def _head_kernel(x_ref, w3_ref, w1_ref, w2_ref, o_ref):
    # Fused: conv3-as-linear (valid because its spatial output is 1x1) + ReLU
    # + global-avg-pool (identity for 1x1) + fc1 + ReLU + fc2.
    # x_ref:  (TB, 400) bf16 flattened conv2-block activations
    # w3_ref: (120, 400) bf16, w1_ref: (84, 120) bf16
    # w2_ref: (NC_PAD, 84) bf16 (zero-padded along the class dim -> lane-dense out)
    # o_ref:  (TB, NC_PAD) f32
    dn = (((1,), (1,)), ((), ()))   # x @ w.T without an in-kernel transpose
    h = lax.dot_general(x_ref[...], w3_ref[...], dn,
                        preferred_element_type=jnp.float32)
    h = jnp.maximum(h, 0.0).astype(w1_ref.dtype)
    h = lax.dot_general(h, w1_ref[...], dn, preferred_element_type=jnp.float32)
    h = jnp.maximum(h, 0.0).astype(w2_ref.dtype)
    o_ref[...] = lax.dot_general(h, w2_ref[...], dn,
                                 preferred_element_type=jnp.float32
                                 ).astype(o_ref.dtype)


# ---------------------------------------------------------------------------
# Plain-JAX glue (layout only)
# ---------------------------------------------------------------------------
def _im2col(x, k):
    # x: (B, C, H, W) -> (B, k*k*C, Ho*Wo), patch order (kh, kw, c)
    B, C, H, W = x.shape
    Ho, Wo = H - k + 1, W - k + 1
    patches = []
    for kh in range(k):
        for kw in range(k):
            patches.append(x[:, :, kh:kh + Ho, kw:kw + Wo])
    cols = jnp.stack(patches, axis=1)            # (B, k*k, C, Ho, Wo)
    return cols.reshape(B, k * k * C, Ho * Wo), Ho, Wo


def _avgpool_matrix(Ho, Wo, ph, pw):
    # Linear operator (Ho*Wo, Hp*Wp) implementing AvgPool2d(ph, pw) (stride=kernel).
    Hp, Wp = Ho // ph, Wo // pw
    rows = jnp.arange(Ho * Wo)
    oh, ow = rows // Wo, rows % Wo
    col_idx = (oh // ph) * Wp + (ow // pw)
    valid = ((oh < Hp * ph) & (ow < Wp * pw)).astype(jnp.float32)
    mat = jax.nn.one_hot(col_idx, Hp * Wp, dtype=jnp.float32) * valid[:, None]
    return mat / float(ph * pw), Hp, Wp


# ---------------------------------------------------------------------------
# Pallas wrappers
# ---------------------------------------------------------------------------
def conv_relu_pool(x, w, pool_hw):
    """conv (no bias, valid padding) -> ReLU -> AvgPool2d(pool_hw), per-sample grid."""
    B, C, H, W = x.shape
    C_out, C_in, k, _ = w.shape
    assert C_in == C
    cols, Ho, Wo = _im2col(x, k)                               # (B, K, N)
    K, N = k * k * C, Ho * Wo
    wf = jnp.transpose(w, (0, 2, 3, 1)).reshape(C_out, K)      # (kh, kw, ci) order
    pool_mat, Hp, Wp = _avgpool_matrix(Ho, Wo, *pool_hw)
    Np = Hp * Wp

    cols = cols.astype(jnp.bfloat16)
    wf = wf.astype(jnp.bfloat16)
    pool_mat = pool_mat.astype(jnp.bfloat16)    # entries are 0 or 1/(ph*pw): exact

    out = pl.pallas_call(
        _conv_relu_pool_kernel,
        out_shape=jax.ShapeDtypeStruct((B, C_out, Np), jnp.float32),
        grid=(B,),
        in_specs=[
            pl.BlockSpec((1, K, N), lambda b: (b, 0, 0)),
            pl.BlockSpec((C_out, K), lambda b: (0, 0)),
            pl.BlockSpec((N, Np), lambda b: (0, 0)),
        ],
        out_specs=pl.BlockSpec((1, C_out, Np), lambda b: (b, 0, 0)),
        compiler_params=pltpu.CompilerParams(
            dimension_semantics=("parallel",)),
    )(cols, wf, pool_mat)
    return out.reshape(B, C_out, Hp, Wp)


def fused_head(x_flat, w3f, w1, w2):
    """relu(x @ W3^T) -> relu(@ W1^T) -> @ W2^T, whole batch in one kernel.

    x_flat: (B, 400) flattened conv2-block output; w3f: (120, 400);
    w1: (84, 120); w2: (num_classes, 84).  Output is computed into a
    lane-dense (B, NC_PAD) block and sliced back to (B, num_classes).
    """
    B, D = x_flat.shape
    H3, _ = w3f.shape
    H1, _ = w1.shape
    NC = w2.shape[0]
    NC_PAD = ((NC + 127) // 128) * 128            # lane-dense output width

    xb = x_flat.astype(jnp.bfloat16)
    w3b = w3f.astype(jnp.bfloat16)
    w1b = w1.astype(jnp.bfloat16)
    w2p = jnp.zeros((NC_PAD, H1), jnp.bfloat16).at[:NC].set(w2.astype(jnp.bfloat16))

    # Tile the batch (parallel axis) when it is large; single block otherwise.
    TB = 128 if (B % 128 == 0) else B
    out = pl.pallas_call(
        _head_kernel,
        out_shape=jax.ShapeDtypeStruct((B, NC_PAD), jnp.float32),
        grid=(B // TB,),
        in_specs=[
            pl.BlockSpec((TB, D), lambda i: (i, 0)),
            pl.BlockSpec((H3, D), lambda i: (0, 0)),
            pl.BlockSpec((H1, H3), lambda i: (0, 0)),
            pl.BlockSpec((NC_PAD, H1), lambda i: (0, 0)),
        ],
        out_specs=pl.BlockSpec((TB, NC_PAD), lambda i: (i, 0)),
        compiler_params=pltpu.CompilerParams(
            dimension_semantics=("parallel",)),
    )(xb, w3b, w1b, w2p)
    return out[:, :NC]


# ---------------------------------------------------------------------------
# Model
# ---------------------------------------------------------------------------
def init_params(key, num_classes=1):
    ks = jax.random.split(key, 5)

    def w(k, shape):
        fan_in = 1
        for s in shape[1:]:
            fan_in *= s
        return jax.random.normal(k, shape, jnp.float32) / jnp.sqrt(fan_in)

    return {
        "conv1": w(ks[0], (6, 2, 5, 5)),
        "conv2": w(ks[1], (16, 6, 5, 5)),
        "conv3": w(ks[2], (120, 16, 5, 5)),
        "fc1":   w(ks[3], (84, 120)),
        "fc2":   w(ks[4], (num_classes, 84)),
    }


@jax.jit
def cnn_lenet_forward(params, x):
    # x: (B, 2, 32, 32) NCHW float32
    B, C, H, W = x.shape
    # Fused conv3+fc head assumes conv3's spatial output is exactly 1x1
    # (canonical 32x32 LeNet input).
    assert (H, W) == (32, 32), "fused conv3+fc head assumes 32x32 inputs"
    x = conv_relu_pool(x, params["conv1"], (2, 2))   # (B, 6, 14, 14)
    x = conv_relu_pool(x, params["conv2"], (2, 2))   # (B, 16, 5, 5)
    x = x.reshape(B, -1)                             # (B, 400), (ci, kh, kw) order
    w3f = params["conv3"].reshape(params["conv3"].shape[0], -1)  # (120, 400)
    # conv3 + ReLU + global-avgpool(1x1) + fc1 + ReLU + fc2, one kernel.
    return fused_head(x, w3f, params["fc1"], params["fc2"])


# Pure-JAX float32 reference for a correctness sanity check.
def _reference_forward(params, x):
    def conv(x, w):
        return jax.lax.conv_general_dilated(
            x, w, (1, 1), "VALID",
            dimension_numbers=("NCHW", "OIHW", "NCHW"))

    def pool(x):
        B, C, H, W = x.shape
        return x.reshape(B, C, H // 2, 2, W // 2, 2).mean((3, 5))

    x = pool(jax.nn.relu(conv(x, params["conv1"])))
    x = pool(jax.nn.relu(conv(x, params["conv2"])))
    x = jax.nn.relu(conv(x, params["conv3"]))
    x = x.mean((2, 3))
    x = jax.nn.relu(x @ params["fc1"].T)
    return x @ params["fc2"].T


if __name__ == "__main__":
    key = jax.random.PRNGKey(0)
    kp, kx = jax.random.split(key)
    params = init_params(kp, num_classes=1)
    # Smallest spatial size compatible with the architecture is 32x32.
    x = jax.random.normal(kx, (2, 2, 32, 32), jnp.float32)

    out = cnn_lenet_forward(params, x)
    out = jax.block_until_ready(out)
    assert out.shape == (2, 1), out.shape

    ref = _reference_forward(params, x)
    # bf16 MXU operands (f32 accumulation) -> compare with a relaxed tolerance.
    assert jnp.allclose(out, ref, rtol=5e-2, atol=5e-2), (out, ref)

    print("KERNEL_OK")
</pallas_src>

<mosaic_0001>
module attributes {stable_mosaic.version = 11 : i64} {
  func.func @_conv_relu_pool_kernel(%arg0: i32, %arg1: memref<1x50x784xbf16, #tpu.memory_space<vmem>>, %arg2: memref<6x50xbf16, #tpu.memory_space<vmem>>, %arg3: memref<784x196xbf16, #tpu.memory_space<vmem>>, %arg4: memref<1x6x196xf32, #tpu.memory_space<vmem>>) attributes {dimension_semantics = [#tpu.dimension_semantics<parallel>], iteration_bounds = array<i64: 2>, scalar_prefetch = 0 : i64, scratch_operands = 0 : i64, tpu.core_type = #tpu.core_type<tc>, window_params = [{transform_indices = @transform_0, window_bounds = array<i64: 1, 50, 784>}, {pipeline_mode = #tpu.pipeline_mode<synchronous>, transform_indices = @transform_1, window_bounds = array<i64: 6, 50>}, {pipeline_mode = #tpu.pipeline_mode<synchronous>, transform_indices = @transform_2, window_bounds = array<i64: 784, 196>}, {transform_indices = @transform_3, window_bounds = array<i64: 1, 6, 196>}]} {
    %c0 = arith.constant 0 : index
    %c0_0 = arith.constant 0 : index
    %0 = vector.load %arg2[%c0, %c0_0] : memref<6x50xbf16, #tpu.memory_space<vmem>>, vector<6x50xbf16>
    %c0_1 = arith.constant 0 : index
    %c0_2 = arith.constant 0 : index
    %c0_3 = arith.constant 0 : index
    %1 = vector.load %arg1[%c0_1, %c0_2, %c0_3] : memref<1x50x784xbf16, #tpu.memory_space<vmem>>, vector<1x50x784xbf16>
    %2 = vector.shape_cast %1 : vector<1x50x784xbf16> to vector<50x784xbf16>
    %cst = arith.constant dense<0.000000e+00> : vector<6x784xf32>
    %3 = tpu.matmul %0, %2, %cst {dimension_numbers = #tpu.dot_dimension_numbers<[1], [0], [0], [1], [0, 0, 1, 1], [], []>} : vector<6x50xbf16>, vector<50x784xbf16>, vector<6x784xf32> -> vector<6x784xf32>
    %cst_4 = arith.constant 0.000000e+00 : f32
    %4 = vector.broadcast %cst_4 : f32 to vector<6x784xf32>
    %5 = arith.maximumf %3, %4 : vector<6x784xf32>
    %6 = arith.truncf %5 : vector<6x784xf32> to vector<6x784xbf16>
    %c0_5 = arith.constant 0 : index
    %c0_6 = arith.constant 0 : index
    %7 = vector.load %arg3[%c0_5, %c0_6] : memref<784x196xbf16, #tpu.memory_space<vmem>>, vector<784x196xbf16>
    %cst_7 = arith.constant dense<0.000000e+00> : vector<6x196xf32>
    %8 = tpu.matmul %6, %7, %cst_7 {dimension_numbers = #tpu.dot_dimension_numbers<[1], [0], [0], [1], [0, 0, 1, 1], [], []>} : vector<6x784xbf16>, vector<784x196xbf16>, vector<6x196xf32> -> vector<6x196xf32>
    %c0_8 = arith.constant 0 : index
    %c0_9 = arith.constant 0 : index
    %c0_10 = arith.constant 0 : index
    %9 = vector.load %arg4[%c0_8, %c0_9, %c0_10] : memref<1x6x196xf32, #tpu.memory_space<vmem>>, vector<1x6x196xf32>
    %10 = vector.shape_cast %9 : vector<1x6x196xf32> to vector<6x196xf32>
    %11 = vector.shape_cast %8 : vector<6x196xf32> to vector<1x6x196xf32>
    tpu.vector_store %arg4[%c0_8, %c0_9, %c0_10], %11 {strides = array<i32>} : memref<1x6x196xf32, #tpu.memory_space<vmem>>, vector<1x6x196xf32>,
    return
  }
  func.func @transform_0(%arg0: i32) -> (i32, i32, i32) {
    %c0_i32 = arith.constant 0 : i32
    %c0_i32_0 = arith.constant 0 : i32
    %c0_i32_1 = arith.constant 0 : i32
    return %arg0, %c0_i32, %c0_i32_0 : i32, i32, i32
  }
  func.func @transform_1(%arg0: i32) -> (i32, i32) {
    %c0_i32 = arith.constant 0 : i32
    %c0_i32_0 = arith.constant 0 : i32
    %c0_i32_1 = arith.constant 0 : i32
    return %c0_i32, %c0_i32_0 : i32, i32
  }
  func.func @transform_2(%arg0: i32) -> (i32, i32) {
    %c0_i32 = arith.constant 0 : i32
    %c0_i32_0 = arith.constant 0 : i32
    %c0_i32_1 = arith.constant 0 : i32
    return %c0_i32, %c0_i32_0 : i32, i32
  }
  func.func @transform_3(%arg0: i32) -> (i32, i32, i32) {
    %c0_i32 = arith.constant 0 : i32
    %c0_i32_0 = arith.constant 0 : i32
    %c0_i32_1 = arith.constant 0 : i32
    return %arg0, %c0_i32, %c0_i32_0 : i32, i32, i32
  }
}

module attributes {stable_mosaic.version = 11 : i64} {
  func.func @_conv_relu_pool_kernel(%arg0: i32, %arg1: memref<1x150x100xbf16, #tpu.memory_space<vmem>>, %arg2: memref<16x150xbf16, #tpu.memory_space<vmem>>, %arg3: memref<100x25xbf16, #tpu.memory_space<vmem>>, %arg4: memref<1x16x25xf32, #tpu.memory_space<vmem>>) attributes {dimension_semantics = [#tpu.dimension_semantics<parallel>], iteration_bounds = array<i64: 2>, scalar_prefetch = 0 : i64, scratch_operands = 0 : i64, tpu.core_type = #tpu.core_type<tc>, window_params = [{transform_indices = @transform_0, window_bounds = array<i64: 1, 150, 100>}, {pipeline_mode = #tpu.pipeline_mode<synchronous>, transform_indices = @transform_1, window_bounds = array<i64: 16, 150>}, {pipeline_mode = #tpu.pipeline_mode<synchronous>, transform_indices = @transform_2, window_bounds = array<i64: 100, 25>}, {transform_indices = @transform_3, window_bounds = array<i64: 1, 16, 25>}]} {
    %c0 = arith.constant 0 : index
    %c0_0 = arith.constant 0 : index
    %0 = vector.load %arg2[%c0, %c0_0] : memref<16x150xbf16, #tpu.memory_space<vmem>>, vector<16x150xbf16>
    %c0_1 = arith.constant 0 : index
    %c0_2 = arith.constant 0 : index
    %c0_3 = arith.constant 0 : index
    %1 = vector.load %arg1[%c0_1, %c0_2, %c0_3] : memref<1x150x100xbf16, #tpu.memory_space<vmem>>, vector<1x150x100xbf16>
    %2 = vector.shape_cast %1 : vector<1x150x100xbf16> to vector<150x100xbf16>
    %cst = arith.constant dense<0.000000e+00> : vector<16x100xf32>
    %3 = tpu.matmul %0, %2, %cst {dimension_numbers = #tpu.dot_dimension_numbers<[1], [0], [0], [1], [0, 0, 1, 1], [], []>} : vector<16x150xbf16>, vector<150x100xbf16>, vector<16x100xf32> -> vector<16x100xf32>
    %cst_4 = arith.constant 0.000000e+00 : f32
    %4 = vector.broadcast %cst_4 : f32 to vector<16x100xf32>
    %5 = arith.maximumf %3, %4 : vector<16x100xf32>
    %6 = arith.truncf %5 : vector<16x100xf32> to vector<16x100xbf16>
    %c0_5 = arith.constant 0 : index
    %c0_6 = arith.constant 0 : index
    %7 = vector.load %arg3[%c0_5, %c0_6] : memref<100x25xbf16, #tpu.memory_space<vmem>>, vector<100x25xbf16>
    %cst_7 = arith.constant dense<0.000000e+00> : vector<16x25xf32>
    %8 = tpu.matmul %6, %7, %cst_7 {dimension_numbers = #tpu.dot_dimension_numbers<[1], [0], [0], [1], [0, 0, 1, 1], [], []>} : vector<16x100xbf16>, vector<100x25xbf16>, vector<16x25xf32> -> vector<16x25xf32>
    %c0_8 = arith.constant 0 : index
    %c0_9 = arith.constant 0 : index
    %c0_10 = arith.constant 0 : index
    %9 = vector.load %arg4[%c0_8, %c0_9, %c0_10] : memref<1x16x25xf32, #tpu.memory_space<vmem>>, vector<1x16x25xf32>
    %10 = vector.shape_cast %9 : vector<1x16x25xf32> to vector<16x25xf32>
    %11 = vector.shape_cast %8 : vector<16x25xf32> to vector<1x16x25xf32>
    tpu.vector_store %arg4[%c0_8, %c0_9, %c0_10], %11 {strides = array<i32>} : memref<1x16x25xf32, #tpu.memory_space<vmem>>, vector<1x16x25xf32>,
    return
  }
  func.func @transform_0(%arg0: i32) -> (i32, i32, i32) {
    %c0_i32 = arith.constant 0 : i32
    %c0_i32_0 = arith.constant 0 : i32
    %c0_i32_1 = arith.constant 0 : i32
    return %arg0, %c0_i32, %c0_i32_0 : i32, i32, i32
  }
  func.func @transform_1(%arg0: i32) -> (i32, i32) {
    %c0_i32 = arith.constant 0 : i32
    %c0_i32_0 = arith.constant 0 : i32
    %c0_i32_1 = arith.constant 0 : i32
    return %c0_i32, %c0_i32_0 : i32, i32
  }
  func.func @transform_2(%arg0: i32) -> (i32, i32) {
    %c0_i32 = arith.constant 0 : i32
    %c0_i32_0 = arith.constant 0 : i32
    %c0_i32_1 = arith.constant 0 : i32
    return %c0_i32, %c0_i32_0 : i32, i32
  }
  func.func @transform_3(%arg0: i32) -> (i32, i32, i32) {
    %c0_i32 = arith.constant 0 : i32
    %c0_i32_0 = arith.constant 0 : i32
    %c0_i32_1 = arith.constant 0 : i32
    return %arg0, %c0_i32, %c0_i32_0 : i32, i32, i32
  }
}

module attributes {stable_mosaic.version = 11 : i64} {
  func.func @_head_kernel(%arg0: i32, %arg1: memref<2x400xbf16, #tpu.memory_space<vmem>>, %arg2: memref<120x400xbf16, #tpu.memory_space<vmem>>, %arg3: memref<84x120xbf16, #tpu.memory_space<vmem>>, %arg4: memref<128x84xbf16, #tpu.memory_space<vmem>>, %arg5: memref<2x128xf32, #tpu.memory_space<vmem>>) attributes {dimension_semantics = [#tpu.dimension_semantics<parallel>], iteration_bounds = array<i64: 1>, scalar_prefetch = 0 : i64, scratch_operands = 0 : i64, tpu.core_type = #tpu.core_type<tc>, window_params = [{transform_indices = @transform_0, window_bounds = array<i64: 2, 400>}, {pipeline_mode = #tpu.pipeline_mode<synchronous>, transform_indices = @transform_1, window_bounds = array<i64: 120, 400>}, {pipeline_mode = #tpu.pipeline_mode<synchronous>, transform_indices = @transform_2, window_bounds = array<i64: 84, 120>}, {pipeline_mode = #tpu.pipeline_mode<synchronous>, transform_indices = @transform_3, window_bounds = array<i64: 128, 84>}, {transform_indices = @transform_4, window_bounds = array<i64: 2, 128>}]} {
    %c0 = arith.constant 0 : index
    %c0_0 = arith.constant 0 : index
    %0 = vector.load %arg1[%c0, %c0_0] : memref<2x400xbf16, #tpu.memory_space<vmem>>, vector<2x400xbf16>
    %c0_1 = arith.constant 0 : index
    %c0_2 = arith.constant 0 : index
    %1 = vector.load %arg2[%c0_1, %c0_2] : memref<120x400xbf16, #tpu.memory_space<vmem>>, vector<120x400xbf16>
    %cst = arith.constant dense<0.000000e+00> : vector<2x120xf32>
    %2 = tpu.matmul %0, %1, %cst {dimension_numbers = #tpu.dot_dimension_numbers<[1], [1], [0], [0], [0, 0, 1, 0], [], []>} : vector<2x400xbf16>, vector<120x400xbf16>, vector<2x120xf32> -> vector<2x120xf32>
    %cst_3 = arith.constant 0.000000e+00 : f32
    %3 = vector.broadcast %cst_3 : f32 to vector<2x120xf32>
    %4 = arith.maximumf %2, %3 : vector<2x120xf32>
    %5 = arith.truncf %4 : vector<2x120xf32> to vector<2x120xbf16>
    %c0_4 = arith.constant 0 : index
    %c0_5 = arith.constant 0 : index
    %6 = vector.load %arg3[%c0_4, %c0_5] : memref<84x120xbf16, #tpu.memory_space<vmem>>, vector<84x120xbf16>
    %cst_6 = arith.constant dense<0.000000e+00> : vector<2x84xf32>
    %7 = tpu.matmul %5, %6, %cst_6 {dimension_numbers = #tpu.dot_dimension_numbers<[1], [1], [0], [0], [0, 0, 1, 0], [], []>} : vector<2x120xbf16>, vector<84x120xbf16>, vector<2x84xf32> -> vector<2x84xf32>
    %cst_7 = arith.constant 0.000000e+00 : f32
    %8 = vector.broadcast %cst_7 : f32 to vector<2x84xf32>
    %9 = arith.maximumf %7, %8 : vector<2x84xf32>
    %10 = arith.truncf %9 : vector<2x84xf32> to vector<2x84xbf16>
    %c0_8 = arith.constant 0 : index
    %c0_9 = arith.constant 0 : index
    %11 = vector.load %arg4[%c0_8, %c0_9] : memref<128x84xbf16, #tpu.memory_space<vmem>>, vector<128x84xbf16>
    %cst_10 = arith.constant dense<0.000000e+00> : vector<2x128xf32>
    %12 = tpu.matmul %10, %11, %cst_10 {dimension_numbers = #tpu.dot_dimension_numbers<[1], [1], [0], [0], [0, 0, 1, 0], [], []>} : vector<2x84xbf16>, vector<128x84xbf16>, vector<2x128xf32> -> vector<2x128xf32>
    %c0_11 = arith.constant 0 : index
    %c0_12 = arith.constant 0 : index
    %13 = vector.load %arg5[%c0_11, %c0_12] : memref<2x128xf32, #tpu.memory_space<vmem>>, vector<2x128xf32>
    tpu.vector_store %arg5[%c0_11, %c0_12], %12 {strides = array<i32>} : memref<2x128xf32, #tpu.memory_space<vmem>>, vector<2x128xf32>,
    return
  }
  func.func @transform_0(%arg0: i32) -> (i32, i32) {
    %c0_i32 = arith.constant 0 : i32
    %c0_i32_0 = arith.constant 0 : i32
    return %arg0, %c0_i32 : i32, i32
  }
  func.func @transform_1(%arg0: i32) -> (i32, i32) {
    %c0_i32 = arith.constant 0 : i32
    %c0_i32_0 = arith.constant 0 : i32
    %c0_i32_1 = arith.constant 0 : i32
    return %c0_i32, %c0_i32_0 : i32, i32
  }
  func.func @transform_2(%arg0: i32) -> (i32, i32) {
    %c0_i32 = arith.constant 0 : i32
    %c0_i32_0 = arith.constant 0 : i32
    %c0_i32_1 = arith.constant 0 : i32
    return %c0_i32, %c0_i32_0 : i32, i32
  }
  func.func @transform_3(%arg0: i32) -> (i32, i32) {
    %c0_i32 = arith.constant 0 : i32
    %c0_i32_0 = arith.constant 0 : i32
    %c0_i32_1 = arith.constant 0 : i32
    return %c0_i32, %c0_i32_0 : i32, i32
  }
  func.func @transform_4(%arg0: i32) -> (i32, i32) {
    %c0_i32 = arith.constant 0 : i32
    %c0_i32_0 = arith.constant 0 : i32
    return %arg0, %c0_i32 : i32, i32
  }
}

</mosaic_0001>

<llo_original>
// kernel: cnn_lenet_forward.3
$region0: #{cnn_lenet_forward.3}
  #allocation0 [shape = 'u32[]', space=smem, size = 0x4, offset = 0x4, fixed_abs, tag = 'smem constant byte address 0x4 - core index']
  #allocation1 [shape = 'u32[144,128]{1,0:T(1,128)}', space=vmem, size = 0x12000, scoped, tag = 'internal scratch']
  %s0 = inlined_call_operand.vmem [shape: bf16[2,50,784], index: 0, kind: input, shape index: {}]
  %s1 = inlined_call_operand.vmem [shape: bf16[6,50], index: 1, kind: input, shape index: {}]
  %s2 = inlined_call_operand.vmem [shape: bf16[784,196], index: 2, kind: input, shape index: {}]
  %s3 = inlined_call_operand.vmem [shape: f32[2,6,196], index: 3, kind: output, shape index: {}]
  %s4 = sld [smem:[#allocation0]]
  $region45: #{cnn_lenet_forward.3} parent=0
    _
  %s6 = ssub.s32 1, %s4
  %s7 = scalar_select 0, %s6, %s4
  loop: start=0, step=1, limit=4
  $region2: #{cnn_lenet_forward.3} parent=0 // loop_pre_header
    _
  $region3: #{cnn_lenet_forward.3} parent=0 // loop_header
    %s9 = sphi 0, %s13
    %p10 = scmp.ge.s32.totalorder %s9, 4
    %s19 = sphi 0, %s21
    %s22 = sphi 0, %s19
    %s23 = sphi 0, %s22
    %s39 = sphi 0, %s23
    %s43 = sphi 0, %s43
    %s45 = sphi 0, %s43
    %s46 = sphi 0, %s45
    %s60 = sphi 0, %s46
    %s64 = sphi 0, %s64
    %s66 = sphi 0, %s64
    %s67 = sphi 0, %s66
    %s81 = sphi 0, %s67
    %s87 = sphi 0, %s89
    %s90 = sphi 0, %s87
    %s91 = sphi 0, %s90
    %s107 = sphi 0, %s91
  $region4: #{cnn_lenet_forward.3} parent=0 // loop_header_branch
    %12 = sbr.rel (%p10) target = $region8
  $region5: #{cnn_lenet_forward.3} parent=0 // loop_body
    %s14 = ssub.s32 %s9, 1
    %s15 = ssub.s32 %s9, 2
    %s16 = sadd.s32 %s9, 1
    %s17 = ssub.s32 %s9, %s16
    %p18 = scmp.eq.s32.totalorder %s17, 0
    %s20 = sadd.s32 %s19, 1
    %s21 = scalar_select %p18, %s19, %s20
    %p24 = pneg %p18
    %p25 = scmp.eq.s32.totalorder %s9, 1
    %p26 = por %p24, %p25
    %p27 = scmp.ne.s32.totalorder %s19, %s22
    %p28 = scmp.eq.s32.totalorder %s9, 0
    %p29 = por %p27, %p28
    %p30 = scmp.ne.s32.totalorder %s19, %s22
    %p31 = scmp.eq.s32.totalorder %s14, 1
    %p32 = por %p30, %p31
    %p33 = scmp.ne.s32.totalorder %s22, %s23
    %p34 = scmp.eq.s32.totalorder %s14, 0
    %p35 = por %p33, %p34
    %p36 = scmp.ne.s32.totalorder %s22, %s23
    %p37 = scmp.eq.s32.totalorder %s15, 1
    %p38 = por %p36, %p37
    %p40 = scmp.ne.s32.totalorder %s23, %s39
    %p41 = scmp.eq.s32.totalorder %s15, 0
    %p42 = por %p40, %p41
    %s44 = sadd.s32 %s43, 1
    %p47 = scmp.eq.s32.totalorder %s9, 1
    %p48 = scmp.ne.s32.totalorder %s43, %s45
    %p49 = scmp.eq.s32.totalorder %s9, 0
    %p50 = por %p48, %p49
    %p51 = scmp.ne.s32.totalorder %s43, %s45
    %p52 = scmp.eq.s32.totalorder %s14, 1
    %p53 = por %p51, %p52
    %p54 = scmp.ne.s32.totalorder %s45, %s46
    %p55 = scmp.eq.s32.totalorder %s14, 0
    %p56 = por %p54, %p55
    %p57 = scmp.ne.s32.totalorder %s45, %s46
    %p58 = scmp.eq.s32.totalorder %s15, 1
    %p59 = por %p57, %p58
    %p61 = scmp.ne.s32.totalorder %s46, %s60
    %p62 = scmp.eq.s32.totalorder %s15, 0
    %p63 = por %p61, %p62
    %s65 = sadd.s32 %s64, 1
    %p68 = scmp.eq.s32.totalorder %s9, 1
    %p69 = scmp.ne.s32.totalorder %s64, %s66
    %p70 = scmp.eq.s32.totalorder %s9, 0
    %p71 = por %p69, %p70
    %p72 = scmp.ne.s32.totalorder %s64, %s66
    %p73 = scmp.eq.s32.totalorder %s14, 1
    %p74 = por %p72, %p73
    %p75 = scmp.ne.s32.totalorder %s66, %s67
    %p76 = scmp.eq.s32.totalorder %s14, 0
    %p77 = por %p75, %p76
    %p78 = scmp.ne.s32.totalorder %s66, %s67
    %p79 = scmp.eq.s32.totalorder %s15, 1
    %p80 = por %p78, %p79
    %p82 = scmp.ne.s32.totalorder %s67, %s81
    %p83 = scmp.eq.s32.totalorder %s15, 0
    %p84 = por %p82, %p83
    %s85 = ssub.s32 %s9, %s16
    %p86 = scmp.eq.s32.totalorder %s85, 0
    %s88 = sadd.s32 %s87, 1
    %s89 = scalar_select %p86, %s87, %s88
    %p92 = pneg %p86
    %p93 = scmp.eq.s32.totalorder %s9, 1
    %p94 = por %p92, %p93
    %p95 = scmp.ne.s32.totalorder %s87, %s90
    %p96 = scmp.eq.s32.totalorder %s9, 0
    %p97 = por %p95, %p96
    %p98 = scmp.ne.s32.totalorder %s87, %s90
    %p99 = scmp.eq.s32.totalorder %s14, 1
    %p100 = por %p98, %p99
    %p101 = scmp.ne.s32.totalorder %s90, %s91
    %p102 = scmp.eq.s32.totalorder %s14, 0
    %p103 = por %p101, %p102
    %p104 = scmp.ne.s32.totalorder %s90, %s91
    %p105 = scmp.eq.s32.totalorder %s15, 1
    %p106 = por %p104, %p105
    %p108 = scmp.ne.s32.totalorder %s91, %s107
    %p109 = scmp.eq.s32.totalorder %s15, 0
    %p110 = por %p108, %p109
    %p111 = scmp.le.s32.totalorder 1, %s9
    %p112 = scmp.lt.s32.totalorder %s9, 3
    %p113 = pnand %p111, %p112
    %p114 = pneg %p113
    // Predicated region
    $region9: #{cnn_lenet_forward.3} parent=5 // pred_check
      _
    $region10: #{cnn_lenet_forward.3} parent=5 // pred_check_branch
      %116 = sbr.rel (%p113) target = $region12
    $region11: #{cnn_lenet_forward.3} parent=5 // pred_region
      %s117 = ssub.s32 %s9, 1
      // Predicated region
      $region13: #{cnn_lenet_forward.3} parent=11 // pred_check
        %p118 = pneg %p56
      $region14: #{cnn_lenet_forward.3} parent=11 // pred_check_branch
        %120 = sbr.rel (%p118) target = $region16
      $region15: #{cnn_lenet_forward.3} parent=11 // pred_region
        _
      $region16: #{cnn_lenet_forward.3} parent=11 // pred_fallthru
        _
      // Predicated region
      $region17: #{cnn_lenet_forward.3} parent=11 // pred_check
        %p121 = pneg %p77
      $region18: #{cnn_lenet_forward.3} parent=11 // pred_check_branch
        %123 = sbr.rel (%p121) target = $region20
      $region19: #{cnn_lenet_forward.3} parent=11 // pred_region
        _
      $region20: #{cnn_lenet_forward.3} parent=11 // pred_fallthru
        _
    $region12: #{cnn_lenet_forward.3} parent=5 // pred_fallthru
      _
    %p124 = scmp.lt.s32.totalorder %s9, 2
    // Predicated region
    $region21: #{cnn_lenet_forward.3} parent=5 // pred_check
      %p125 = pneg %p124
    $region22: #{cnn_lenet_forward.3} parent=5 // pred_check_branch
      %127 = sbr.rel (%p125) target = $region24
    $region23: #{cnn_lenet_forward.3} parent=5 // pred_region
      // Predicated region
      $region25: #{cnn_lenet_forward.3} parent=23 // pred_check
        %p128 = pneg %p29
      $region26: #{cnn_lenet_forward.3} parent=23 // pred_check_branch
        %130 = sbr.rel (%p128) target = $region28
      $region27: #{cnn_lenet_forward.3} parent=23 // pred_region
        %p131 = scmp.lt.s32.totalorder %s9, 1
        %s132 = scalar_select %p131, %s9, 1
        %s133 = smul.addr %s132, 49
        %s134 = smul.addr %s133, 4
        %s135 = scalar_lea.vmem %s0, %s134
      $region28: #{cnn_lenet_forward.3} parent=23 // pred_fallthru
        _
    $region24: #{cnn_lenet_forward.3} parent=5 // pred_fallthru
      _
    %p136 = scmp.le.s32.totalorder 1, %s9
    %p137 = scmp.lt.s32.totalorder %s9, 3
    %p138 = pnand %p136, %p137
    %p139 = pneg %p138
    // Predicated region
    $region29: #{cnn_lenet_forward.3} parent=5 // pred_check
      _
    $region30: #{cnn_lenet_forward.3} parent=5 // pred_check_branch
      %141 = sbr.rel (%p138) target = $region32
    $region31: #{cnn_lenet_forward.3} parent=5 // pred_region
      %s142 = ssub.s32 %s9, 1
      %p143 = scmp.lt.s32.totalorder %s14, 1
      %s144 = scalar_select %p143, %s14, 1
      %s145 = smul.addr %s144, 49
      %s146 = smul.addr %s145, 4
      %s147 = scalar_lea.vmem %s0, %s146
      %p148 = pneg %p35
      %p149 = pneg %p32
      %p150 = pneg %p56
      %p151 = pneg %p53
      %p152 = pneg %p77
      %p153 = pneg %p74
      %p154 = pneg %p103
      %p155 = pneg %p100
      %p156 = scmp.lt.s32.totalorder %s14, 1
      %s157 = scalar_select %p156, %s14, 1
      %s158 = smul.addr %s157, 2
      %s159 = smul.addr %s158, 8
      %s160 = scalar_lea.vmem %s3, %s159
      %p161 = scmp.lt.s32.totalorder %s14, 1
      %s162 = scalar_select %p161, %s14, 1
      %s163 = smul.addr %s162, 49
      %s164 = smul.addr %s163, 4
      %s165 = scalar_lea.vmem %s0, %s164
      %p166 = scmp.lt.s32.totalorder %s14, 1
      %s167 = scalar_select %p166, %s14, 1
      %s168 = smul.addr %s167, 2
      %s169 = smul.addr %s168, 8
      %s170 = scalar_lea.vmem %s3, %s169
      %v172 = vld [vmem:[%s1] sm:$0x7]
      %v173 = vld [vmem:[%s165] sm:$0xff]
      %v174 = vld [vmem:[%s165 + $0x8] sm:$0xff]
      %v175 = vld [vmem:[%s165 + $0x10] sm:$0xff]
      %v176 = vld [vmem:[%s165 + $0x18] sm:$0xf]
      %v177 = vld [vmem:[%s165 + $0x1c] sm:$0xff]
      %v178 = vld [vmem:[%s165 + $0x24] sm:$0xff]
      %v179 = vld [vmem:[%s165 + $0x2c] sm:$0xff]
      %v180 = vld [vmem:[%s165 + $0x34] sm:$0xf]
      %v181 = vld [vmem:[%s165 + $0x38] sm:$0xff]
      %v182 = vld [vmem:[%s165 + $0x40] sm:$0xff]
      %v183 = vld [vmem:[%s165 + $0x48] sm:$0xff]
      %v184 = vld [vmem:[%s165 + $0x50] sm:$0xf]
      %v185 = vld [vmem:[%s165 + $0x54] sm:$0xff]
      %v186 = vld [vmem:[%s165 + $0x5c] sm:$0xff]
      %v187 = vld [vmem:[%s165 + $0x64] sm:$0xff]
      %v188 = vld [vmem:[%s165 + $0x6c] sm:$0xf]
      %v189 = vld [vmem:[%s165 + $0x70] sm:$0xff]
      %v190 = vld [vmem:[%s165 + $0x78] sm:$0xff]
      %v191 = vld [vmem:[%s165 + $0x80] sm:$0xff]
      %v192 = vld [vmem:[%s165 + $0x88] sm:$0xf]
      %v193 = vld [vmem:[%s165 + $0x8c] sm:$0xff]
      %v194 = vld [vmem:[%s165 + $0x94] sm:$0xff]
      %v195 = vld [vmem:[%s165 + $0x9c] sm:$0xff]
      %v196 = vld [vmem:[%s165 + $0xa4] sm:$0xf]
      %v197 = vld [vmem:[%s165 + $0xa8] sm:$0x11]
      %v198 = vld [vmem:[%s165 + $0xb0] sm:$0x11]
      %v199 = vld [vmem:[%s165 + $0xb8] sm:$0x11]
      %v200 = vld [vmem:[%s165 + $0xc0] sm:$0x1]
      %v229 = vunpack.c.l.b16 %v173
      %v230 = vunpack.c.h.b16 %v173
      %v231 = vunpack.c.l.b16 %v174
      %v232 = vunpack.c.h.b16 %v174
      %v233 = vunpack.c.l.b16 %v175
      %v234 = vunpack.c.h.b16 %v175
      %v235 = vunpack.c.l.b16 %v176
      %v236 = vunpack.c.l.b16 %v177
      %v237 = vunpack.c.h.b16 %v177
      %v238 = vunpack.c.l.b16 %v178
      %v239 = vunpack.c.h.b16 %v178
      %v240 = vunpack.c.l.b16 %v179
      %v241 = vunpack.c.h.b16 %v179
      %v242 = vunpack.c.l.b16 %v180
      %v243 = vunpack.c.l.b16 %v181
      %v244 = vunpack.c.h.b16 %v181
      %v245 = vunpack.c.l.b16 %v182
      %v246 = vunpack.c.h.b16 %v182
      %v247 = vunpack.c.l.b16 %v183
      %v248 = vunpack.c.h.b16 %v183
      %v249 = vunpack.c.l.b16 %v184
      %v250 = vunpack.c.l.b16 %v185
      %v251 = vunpack.c.h.b16 %v185
      %v252 = vunpack.c.l.b16 %v186
      %v253 = vunpack.c.h.b16 %v186
      %v254 = vunpack.c.l.b16 %v187
      %v255 = vunpack.c.h.b16 %v187
      %v256 = vunpack.c.l.b16 %v188
      %v257 = vunpack.c.l.b16 %v189
      %v258 = vunpack.c.h.b16 %v189
      %v259 = vunpack.c.l.b16 %v190
      %v260 = vunpack.c.h.b16 %v190
      %v261 = vunpack.c.l.b16 %v191
      %v262 = vunpack.c.h.b16 %v191
      %v263 = vunpack.c.l.b16 %v192
      %v264 = vunpack.c.l.b16 %v193
      %v265 = vunpack.c.h.b16 %v193
      %v266 = vunpack.c.l.b16 %v194
      %v267 = vunpack.c.h.b16 %v194
      %v268 = vunpack.c.l.b16 %v195
      %v269 = vunpack.c.h.b16 %v195
      %v270 = vunpack.c.l.b16 %v196
      %v271 = vunpack.c.l.b16 %v197
      %v272 = vunpack.c.h.b16 %v197
      %v273 = vunpack.c.l.b16 %v198
      %v274 = vunpack.c.h.b16 %v198
      %v275 = vunpack.c.l.b16 %v199
      %v276 = vunpack.c.h.b16 %v199
      %v277 = vunpack.c.l.b16 %v200
      %v278 = vpack.c.b16 %v236, %v229
      %v279 = vpack.c.b16 %v237, %v230
      %v280 = vpack.c.b16 %v238, %v231
      %v281 = vpack.c.b16 %v239, %v232
      %v282 = vpack.c.b16 %v240, %v233
      %v283 = vpack.c.b16 %v241, %v234
      %v284 = vpack.c.b16 %v242, %v235
      %v285 = vpack.c.b16 %v250, %v243
      %v286 = vpack.c.b16 %v251, %v244
      %v287 = vpack.c.b16 %v252, %v245
      %v288 = vpack.c.b16 %v253, %v246
      %v289 = vpack.c.b16 %v254, %v247
      %v290 = vpack.c.b16 %v255, %v248
      %v291 = vpack.c.b16 %v256, %v249
      %v292 = vpack.c.b16 %v264, %v257
      %v293 = vpack.c.b16 %v265, %v258
      %v294 = vpack.c.b16 %v266, %v259
      %v295 = vpack.c.b16 %v267, %v260
      %v296 = vpack.c.b16 %v268, %v261
      %v297 = vpack.c.b16 %v269, %v262
      %v298 = vpack.c.b16 %v270, %v263
      %v299 = vpack.c.b16 %v271, %v271
      %v300 = vpack.c.b16 %v272, %v272
      %v301 = vpack.c.b16 %v273, %v273
      %v302 = vpack.c.b16 %v274, %v274
      %v303 = vpack.c.b16 %v275, %v275
      %v304 = vpack.c.b16 %v276, %v276
      %v305 = vpack.c.b16 %v277, %v277
      %vm327 = vcmask 408576
      %v329 = vsel %vm327, %v172, 0
      %vm331 = vcmask 1040384
      %v333 = vsel %vm331, %v299, 0
      %v336 = vsel %vm331, %v300, 0
      %v339 = vsel %vm331, %v301, 0
      %v342 = vsel %vm331, %v302, 0
      %v345 = vsel %vm331, %v303, 0
      %v348 = vsel %vm331, %v304, 0
      %v351 = vsel %vm331, %v305, 0
      %353 = vmatprep.subr.bf16.mxu0 %v279
      %354 = vmatpush1.bf16.msra.mxu0 %v278
      %355 = vmatprep.subr.bf16.mxu0 %v286
      %356 = vmatpush1.bf16.msra.mxu0 %v285
      %357 = vmatprep.subr.bf16.mxu0 %v293
      %358 = vmatpush1.bf16.msra.mxu0 %v292
      %359 = vmatprep.subr.bf16.mxu0 %v336
      %360 = vmatpush1.bf16.msra.mxu0 %v333
      %361 = vmatprep.subr.bf16.mxu0 0
      %362 = vmatpush1.bf16.msra.mxu0 0
      %363 = vmatprep.subr.bf16.mxu0 0
      %364 = vmatpush1.bf16.msra.mxu0 0
      %365 = vmatprep.subr.bf16.mxu0 0
      %366 = vmatpush1.bf16.msra.mxu0 0
      %367 = vmatprep.subr.bf16.mxu0 0
      %368 = vmatpush1.bf16.msra.mxu0 0
      %369 = vmatprep.subr.bf16.mxu0 0
      %370 = vmatpush1.bf16.msra.mxu0 0
      %371 = vmatprep.subr.bf16.mxu0 0
      %372 = vmatpush1.bf16.msra.mxu0 0
      %373 = vmatprep.subr.bf16.mxu0 0
      %374 = vmatpush1.bf16.msra.mxu0 0
      %375 = vmatprep.subr.bf16.mxu0 0
      %376 = vmatpush1.bf16.msra.mxu0 0
      %377 = vmatprep.subr.bf16.mxu0 0
      %378 = vmatpush1.bf16.msra.mxu0 0
      %379 = vmatprep.subr.bf16.mxu0 0
      %380 = vmatpush1.bf16.msra.mxu0 0
      %381 = vmatprep.subr.bf16.mxu0 0
      %382 = vmatpush1.bf16.msra.mxu0 0
      %383 = vmatprep.subr.bf16.mxu0 0
      %384 = vmatpush1.bf16.msra.mxu0 0
      %385 = vmatprep.mubr.bf16.mxu0 0
      %386 = vmatmul.mubr.bf16.gmra.mrb[0].mxu0 %v329
      %v387 = vpop.f32.mrb[0].mxu0
      %v388 = vadd.f32 0.0, %v387
      %v389 = vpop.f32.mrb[0].mxu0
      %v390 = vadd.f32 0.0, %v389
      %v391 = vpop.f32.mrb[0].mxu0
      %v392 = vpop.f32.mrb[0].mxu0
      %393 = vdwg.mxu0
      %394 = vmatprep.subr.bf16.mxu0 %v281
      %395 = vmatpush1.bf16.msra.mxu0 %v280
      %396 = vmatprep.subr.bf16.mxu0 %v288
      %397 = vmatpush1.bf16.msra.mxu0 %v287
      %398 = vmatprep.subr.bf16.mxu0 %v295
      %399 = vmatpush1.bf16.msra.mxu0 %v294
      %400 = vmatprep.subr.bf16.mxu0 %v342
      %401 = vmatpush1.bf16.msra.mxu0 %v339
      %402 = vmatprep.subr.bf16.mxu0 0
      %403 = vmatpush1.bf16.msra.mxu0 0
      %404 = vmatprep.subr.bf16.mxu0 0
      %405 = vmatpush1.bf16.msra.mxu0 0
      %406 = vmatprep.subr.bf16.mxu0 0
      %407 = vmatpush1.bf16.msra.mxu0 0
      %408 = vmatprep.subr.bf16.mxu0 0
      %409 = vmatpush1.bf16.msra.mxu0 0
      %410 = vmatprep.subr.bf16.mxu0 0
      %411 = vmatpush1.bf16.msra.mxu0 0
      %412 = vmatprep.subr.bf16.mxu0 0
      %413 = vmatpush1.bf16.msra.mxu0 0
      %414 = vmatprep.subr.bf16.mxu0 0
      %415 = vmatpush1.bf16.msra.mxu0 0
      %416 = vmatprep.subr.bf16.mxu0 0
      %417 = vmatpush1.bf16.msra.mxu0 0
      %418 = vmatprep.subr.bf16.mxu0 0
      %419 = vmatpush1.bf16.msra.mxu0 0
      %420 = vmatprep.subr.bf16.mxu0 0
      %421 = vmatpush1.bf16.msra.mxu0 0
      %422 = vmatprep.subr.bf16.mxu0 0
      %423 = vmatpush1.bf16.msra.mxu0 0
      %424 = vmatprep.subr.bf16.mxu0 0
      %425 = vmatpush1.bf16.msra.mxu0 0
      %426 = vmatprep.mubr.bf16.mxu0 0
      %427 = vmatmul.mubr.bf16.gmra.mrb[0].mxu0 %v329
      %v428 = vpop.f32.mrb[0].mxu0
      %v429 = vadd.f32 0.0, %v428
      %v430 = vpop.f32.mrb[0].mxu0
      %v431 = vadd.f32 0.0, %v430
      %v432 = vpop.f32.mrb[0].mxu0
      %v433 = vpop.f32.mrb[0].mxu0
      %434 = vdwg.mxu0
      %435 = vmatprep.subr.bf16.mxu0 %v283
      %436 = vmatpush1.bf16.msra.mxu0 %v282
      %437 = vmatprep.subr.bf16.mxu0 %v290
      %438 = vmatpush1.bf16.msra.mxu0 %v289
      %439 = vmatprep.subr.bf16.mxu0 %v297
      %440 = vmatpush1.bf16.msra.mxu0 %v296
      %441 = vmatprep.subr.bf16.mxu0 %v348
      %442 = vmatpush1.bf16.msra.mxu0 %v345
      %443 = vmatprep.subr.bf16.mxu0 0
      %444 = vmatpush1.bf16.msra.mxu0 0
      %445 = vmatprep.subr.bf16.mxu0 0
      %446 = vmatpush1.bf16.msra.mxu0 0
      %447 = vmatprep.subr.bf16.mxu0 0
      %448 = vmatpush1.bf16.msra.mxu0 0
      %449 = vmatprep.subr.bf16.mxu0 0
      %450 = vmatpush1.bf16.msra.mxu0 0
      %451 = vmatprep.subr.bf16.mxu0 0
      %452 = vmatpush1.bf16.msra.mxu0 0
      %453 = vmatprep.subr.bf16.mxu0 0
      %454 = vmatpush1.bf16.msra.mxu0 0
      %455 = vmatprep.subr.bf16.mxu0 0
      %456 = vmatpush1.bf16.msra.mxu0 0
      %457 = vmatprep.subr.bf16.mxu0 0
      %458 = vmatpush1.bf16.msra.mxu0 0
      %459 = vmatprep.subr.bf16.mxu0 0
      %460 = vmatpush1.bf16.msra.mxu0 0
      %461 = vmatprep.subr.bf16.mxu0 0
      %462 = vmatpush1.bf16.msra.mxu0 0
      %463 = vmatprep.subr.bf16.mxu0 0
      %464 = vmatpush1.bf16.msra.mxu0 0
      %465 = vmatprep.subr.bf16.mxu0 0
      %466 = vmatpush1.bf16.msra.mxu0 0
      %467 = vmatprep.mubr.bf16.mxu0 0
      %468 = vmatmul.mubr.bf16.gmra.mrb[0].mxu0 %v329
      %v469 = vpop.f32.mrb[0].mxu0
      %v470 = vadd.f32 0.0, %v469
      %v471 = vpop.f32.mrb[0].mxu0
      %v472 = vadd.f32 0.0, %v471
      %v473 = vpop.f32.mrb[0].mxu0
      %v474 = vpop.f32.mrb[0].mxu0
      %475 = vdwg.mxu0
      %476 = vmatprep.subr.bf16.mxu0 0
      %477 = vmatpush1.bf16.msra.mxu0 %v284
      %478 = vmatprep.subr.bf16.mxu0 0
      %479 = vmatpush1.bf16.msra.mxu0 %v291
      %480 = vmatprep.subr.bf16.mxu0 0
      %481 = vmatpush1.bf16.msra.mxu0 %v298
      %482 = vmatprep.subr.bf16.mxu0 0
      %483 = vmatpush1.bf16.msra.mxu0 %v351
      %484 = vmatprep.subr.bf16.mxu0 0
      %485 = vmatpush1.bf16.msra.mxu0 0
      %486 = vmatprep.subr.bf16.mxu0 0
      %487 = vmatpush1.bf16.msra.mxu0 0
      %488 = vmatprep.subr.bf16.mxu0 0
      %489 = vmatpush1.bf16.msra.mxu0 0
      %490 = vmatprep.subr.bf16.mxu0 0
      %491 = vmatpush1.bf16.msra.mxu0 0
      %492 = vmatprep.subr.bf16.mxu0 0
      %493 = vmatpush1.bf16.msra.mxu0 0
      %494 = vmatprep.subr.bf16.mxu0 0
      %495 = vmatpush1.bf16.msra.mxu0 0
      %496 = vmatprep.subr.bf16.mxu0 0
      %497 = vmatpush1.bf16.msra.mxu0 0
      %498 = vmatprep.subr.bf16.mxu0 0
      %499 = vmatpush1.bf16.msra.mxu0 0
      %500 = vmatprep.subr.bf16.mxu0 0
      %501 = vmatpush1.bf16.msra.mxu0 0
      %502 = vmatprep.subr.bf16.mxu0 0
      %503 = vmatpush1.bf16.msra.mxu0 0
      %504 = vmatprep.subr.bf16.mxu0 0
      %505 = vmatpush1.bf16.msra.mxu0 0
      %506 = vmatprep.subr.bf16.mxu0 0
      %507 = vmatpush1.bf16.msra.mxu0 0
      %508 = vmatprep.mubr.bf16.mxu0 0
      %509 = vmatmul.mubr.bf16.gmra.mrb[0].mxu0 %v329
      %v510 = vpop.f32.mrb[0].mxu0
      %v511 = vadd.f32 0.0, %v510
      %v512 = vpop.f32.mrb[0].mxu0
      %v513 = vpop.f32.mrb[0].mxu0
      %v514 = vpop.f32.mrb[0].mxu0
      %515 = vdwg.mxu0
      %v516 = vmax.f32 %v388, 0.0
      %v517 = vmax.f32 %v390, 0.0
      %v518 = vmax.f32 %v429, 0.0
      %v519 = vmax.f32 %v431, 0.0
      %v520 = vmax.f32 %v470, 0.0
      %v521 = vmax.f32 %v472, 0.0
      %v522 = vmax.f32 %v511, 0.0
      %v523 = vpack.c.bf16 %v516, %v516
      %v524 = vpack.c.bf16 %v517, %v517
      %v525 = vpack.c.bf16 %v518, %v518
      %v526 = vpack.c.bf16 %v519, %v519
      %v527 = vpack.c.bf16 %v520, %v520
      %v528 = vpack.c.bf16 %v521, %v521
      %v529 = vpack.c.bf16 %v522, %v522
      %v530 = vld [vmem:[%s2] sm:$0xff]
      %v531 = vld [vmem:[%s2 + $0x8] sm:$0xff]
      %v532 = vld [vmem:[%s2 + $0x10] sm:$0xff]
      %v533 = vld [vmem:[%s2 + $0x18] sm:$0xff]
      %v534 = vld [vmem:[%s2 + $0x20] sm:$0xff]
      %v535 = vld [vmem:[%s2 + $0x28] sm:$0xff]
      %v536 = vld [vmem:[%s2 + $0x30] sm:$0xff]
      %v537 = vld [vmem:[%s2 + $0x38] sm:$0xff]
      %v538 = vld [vmem:[%s2 + $0x40] sm:$0xff]
      %v539 = vld [vmem:[%s2 + $0x48] sm:$0xff]
      %v540 = vld [vmem:[%s2 + $0x50] sm:$0xff]
      %v541 = vld [vmem:[%s2 + $0x58] sm:$0xff]
      %v542 = vld [vmem:[%s2 + $0x60] sm:$0xff]
      %v543 = vld [vmem:[%s2 + $0x68] sm:$0xff]
      %v544 = vld [vmem:[%s2 + $0x70] sm:$0xff]
      %v545 = vld [vmem:[%s2 + $0x78] sm:$0xff]
      %v546 = vld [vmem:[%s2 + $0x80] sm:$0xff]
      %v547 = vld [vmem:[%s2 + $0x88] sm:$0xff]
      %v548 = vld [vmem:[%s2 + $0x90] sm:$0xff]
      %v549 = vld [vmem:[%s2 + $0x98] sm:$0xff]
      %v550 = vld [vmem:[%s2 + $0xa0] sm:$0xff]
      %v551 = vld [vmem:[%s2 + $0xa8] sm:$0xff]
      %v552 = vld [vmem:[%s2 + $0xb0] sm:$0xff]
      %v553 = vld [vmem:[%s2 + $0xb8] sm:$0xff]
      %v554 = vld [vmem:[%s2 + $0xc0] sm:$0xff]
      %v555 = vld [vmem:[%s2 + $0xc8] sm:$0xff]
      %v556 = vld [vmem:[%s2 + $0xd0] sm:$0xff]
      %v557 = vld [vmem:[%s2 + $0xd8] sm:$0xff]
      %v558 = vld [vmem:[%s2 + $0xe0] sm:$0xff]
      %v559 = vld [vmem:[%s2 + $0xe8] sm:$0xff]
      %v560 = vld [vmem:[%s2 + $0xf0] sm:$0xff]
      %v561 = vld [vmem:[%s2 + $0xf8] sm:$0xff]
      %v562 = vld [vmem:[%s2 + $0x100] sm:$0xff]
      %v563 = vld [vmem:[%s2 + $0x108] sm:$0xff]
      %v564 = vld [vmem:[%s2 + $0x110] sm:$0xff]
      %v565 = vld [vmem:[%s2 + $0x118] sm:$0xff]
      %v566 = vld [vmem:[%s2 + $0x120] sm:$0xff]
      %v567 = vld [vmem:[%s2 + $0x128] sm:$0xff]
      %v568 = vld [vmem:[%s2 + $0x130] sm:$0xff]
      %v569 = vld [vmem:[%s2 + $0x138] sm:$0xff]
      %v570 = vld [vmem:[%s2 + $0x140] sm:$0xff]
      %v571 = vld [vmem:[%s2 + $0x148] sm:$0xff]
      %v572 = vld [vmem:[%s2 + $0x150] sm:$0xff]
      %v573 = vld [vmem:[%s2 + $0x158] sm:$0xff]
      %v574 = vld [vmem:[%s2 + $0x160] sm:$0xff]
      %v575 = vld [vmem:[%s2 + $0x168] sm:$0xff]
      %v576 = vld [vmem:[%s2 + $0x170] sm:$0xff]
      %v577 = vld [vmem:[%s2 + $0x178] sm:$0xff]
      %v578 = vld [vmem:[%s2 + $0x180] sm:$0xff]
      %v579 = vld [vmem:[%s2 + $0x188] sm:$0xff]
      %v580 = vld [vmem:[%s2 + $0x190] sm:$0xff]
      %v581 = vld [vmem:[%s2 + $0x198] sm:$0xff]
      %v582 = vld [vmem:[%s2 + $0x1a0] sm:$0xff]
      %v583 = vld [vmem:[%s2 + $0x1a8] sm:$0xff]
      %v584 = vld [vmem:[%s2 + $0x1b0] sm:$0xff]
      %v585 = vld [vmem:[%s2 + $0x1b8] sm:$0xff]
      %v586 = vld [vmem:[%s2 + $0x1c0] sm:$0xff]
      %v587 = vld [vmem:[%s2 + $0x1c8] sm:$0xff]
      %v588 = vld [vmem:[%s2 + $0x1d0] sm:$0xff]
      %v589 = vld [vmem:[%s2 + $0x1d8] sm:$0xff]
      %v590 = vld [vmem:[%s2 + $0x1e0] sm:$0xff]
      %v591 = vld [vmem:[%s2 + $0x1e8] sm:$0xff]
      %v592 = vld [vmem:[%s2 + $0x1f0] sm:$0xff]
      %v593 = vld [vmem:[%s2 + $0x1f8] sm:$0xff]
      %v594 = vld [vmem:[%s2 + $0x200] sm:$0xff]
      %v595 = vld [vmem:[%s2 + $0x208] sm:$0xff]
      %v596 = vld [vmem:[%s2 + $0x210] sm:$0xff]
      %v597 = vld [vmem:[%s2 + $0x218] sm:$0xff]
      %v598 = vld [vmem:[%s2 + $0x220] sm:$0xff]
      %v599 = vld [vmem:[%s2 + $0x228] sm:$0xff]
      %v600 = vld [vmem:[%s2 + $0x230] sm:$0xff]
      %v601 = vld [vmem:[%s2 + $0x238] sm:$0xff]
      %v602 = vld [vmem:[%s2 + $0x240] sm:$0xff]
      %v603 = vld [vmem:[%s2 + $0x248] sm:$0xff]
      %v604 = vld [vmem:[%s2 + $0x250] sm:$0xff]
      %v605 = vld [vmem:[%s2 + $0x258] sm:$0xff]
      %v606 = vld [vmem:[%s2 + $0x260] sm:$0xff]
      %v607 = vld [vmem:[%s2 + $0x268] sm:$0xff]
      %v608 = vld [vmem:[%s2 + $0x270] sm:$0xff]
      %v609 = vld [vmem:[%s2 + $0x278] sm:$0xff]
      %v610 = vld [vmem:[%s2 + $0x280] sm:$0xff]
      %v611 = vld [vmem:[%s2 + $0x288] sm:$0xff]
      %v612 = vld [vmem:[%s2 + $0x290] sm:$0xff]
      %v613 = vld [vmem:[%s2 + $0x298] sm:$0xff]
      %v614 = vld [vmem:[%s2 + $0x2a0] sm:$0xff]
      %v615 = vld [vmem:[%s2 + $0x2a8] sm:$0xff]
      %v616 = vld [vmem:[%s2 + $0x2b0] sm:$0xff]
      %v617 = vld [vmem:[%s2 + $0x2b8] sm:$0xff]
      %v618 = vld [vmem:[%s2 + $0x2c0] sm:$0xff]
      %v619 = vld [vmem:[%s2 + $0x2c8] sm:$0xff]
      %v620 = vld [vmem:[%s2 + $0x2d0] sm:$0xff]
      %v621 = vld [vmem:[%s2 + $0x2d8] sm:$0xff]
      %v622 = vld [vmem:[%s2 + $0x2e0] sm:$0xff]
      %v623 = vld [vmem:[%s2 + $0x2e8] sm:$0xff]
      %v624 = vld [vmem:[%s2 + $0x2f0] sm:$0xff]
      %v625 = vld [vmem:[%s2 + $0x2f8] sm:$0xff]
      %v626 = vld [vmem:[%s2 + $0x300] sm:$0xff]
      %v627 = vld [vmem:[%s2 + $0x308] sm:$0xff]
      %v726 = vunpack.c.l.b16 %v530
      %v727 = vunpack.c.h.b16 %v530
      %v728 = vunpack.c.l.b16 %v531
      %v729 = vunpack.c.h.b16 %v531
      %v730 = vunpack.c.l.b16 %v532
      %v731 = vunpack.c.h.b16 %v532
      %v732 = vunpack.c.l.b16 %v533
      %v733 = vunpack.c.h.b16 %v533
      %v734 = vunpack.c.l.b16 %v534
      %v735 = vunpack.c.h.b16 %v534
      %v736 = vunpack.c.l.b16 %v535
      %v737 = vunpack.c.h.b16 %v535
      %v738 = vunpack.c.l.b16 %v536
      %v739 = vunpack.c.h.b16 %v536
      %v740 = vunpack.c.l.b16 %v537
      %v741 = vunpack.c.h.b16 %v537
      %v742 = vunpack.c.l.b16 %v538
      %v743 = vunpack.c.h.b16 %v538
      %v744 = vunpack.c.l.b16 %v539
      %v745 = vunpack.c.h.b16 %v539
      %v746 = vunpack.c.l.b16 %v540
      %v747 = vunpack.c.h.b16 %v540
      %v748 = vunpack.c.l.b16 %v541
      %v749 = vunpack.c.h.b16 %v541
      %v750 = vunpack.c.l.b16 %v542
      %v751 = vunpack.c.h.b16 %v542
      %v752 = vunpack.c.l.b16 %v543
      %v753 = vunpack.c.h.b16 %v543
      %v754 = vunpack.c.l.b16 %v544
      %v755 = vunpack.c.h.b16 %v544
      %v756 = vunpack.c.l.b16 %v545
      %v757 = vunpack.c.h.b16 %v545
      %v758 = vunpack.c.l.b16 %v546
      %v759 = vunpack.c.h.b16 %v546
      %v760 = vunpack.c.l.b16 %v547
      %v761 = vunpack.c.h.b16 %v547
      %v762 = vunpack.c.l.b16 %v548
      %v763 = vunpack.c.h.b16 %v548
      %v764 = vunpack.c.l.b16 %v549
      %v765 = vunpack.c.h.b16 %v549
      %v766 = vunpack.c.l.b16 %v550
      %v767 = vunpack.c.h.b16 %v550
      %v768 = vunpack.c.l.b16 %v551
      %v769 = vunpack.c.h.b16 %v551
      %v770 = vunpack.c.l.b16 %v552
      %v771 = vunpack.c.h.b16 %v552
      %v772 = vunpack.c.l.b16 %v553
      %v773 = vunpack.c.h.b16 %v553
      %v774 = vunpack.c.l.b16 %v554
      %v775 = vunpack.c.h.b16 %v554
      %v776 = vunpack.c.l.b16 %v555
      %v777 = vunpack.c.h.b16 %v555
      %v778 = vunpack.c.l.b16 %v556
      %v779 = vunpack.c.h.b16 %v556
      %v780 = vunpack.c.l.b16 %v557
      %v781 = vunpack.c.h.b16 %v557
      %v782 = vunpack.c.l.b16 %v558
      %v783 = vunpack.c.h.b16 %v558
      %v784 = vunpack.c.l.b16 %v559
      %v785 = vunpack.c.h.b16 %v559
      %v786 = vunpack.c.l.b16 %v560
      %v787 = vunpack.c.h.b16 %v560
      %v788 = vunpack.c.l.b16 %v561
      %v789 = vunpack.c.h.b16 %v561
      %v790 = vunpack.c.l.b16 %v562
      %v791 = vunpack.c.h.b16 %v562
      %v792 = vunpack.c.l.b16 %v563
      %v793 = vunpack.c.h.b16 %v563
      %v794 = vunpack.c.l.b16 %v564
      %v795 = vunpack.c.h.b16 %v564
      %v796 = vunpack.c.l.b16 %v565
      %v797 = vunpack.c.h.b16 %v565
      %v798 = vunpack.c.l.b16 %v566
      %v799 = vunpack.c.h.b16 %v566
      %v800 = vunpack.c.l.b16 %v567
      %v801 = vunpack.c.h.b16 %v567
      %v802 = vunpack.c.l.b16 %v568
      %v803 = vunpack.c.h.b16 %v568
      %v804 = vunpack.c.l.b16 %v569
      %v805 = vunpack.c.h.b16 %v569
      %v806 = vunpack.c.l.b16 %v570
      %v807 = vunpack.c.h.b16 %v570
      %v808 = vunpack.c.l.b16 %v571
      %v809 = vunpack.c.h.b16 %v571
      %v810 = vunpack.c.l.b16 %v572
      %v811 = vunpack.c.h.b16 %v572
      %v812 = vunpack.c.l.b16 %v573
      %v813 = vunpack.c.h.b16 %v573
      %v814 = vunpack.c.l.b16 %v574
      %v815 = vunpack.c.h.b16 %v574
      %v816 = vunpack.c.l.b16 %v575
      %v817 = vunpack.c.h.b16 %v575
      %v818 = vunpack.c.l.b16 %v576
      %v819 = vunpack.c.h.b16 %v576
      %v820 = vunpack.c.l.b16 %v577
      %v821 = vunpack.c.h.b16 %v577
      %v822 = vunpack.c.l.b16 %v578
      %v823 = vunpack.c.h.b16 %v578
      %v824 = vunpack.c.l.b16 %v579
      %v825 = vunpack.c.h.b16 %v579
      %v826 = vunpack.c.l.b16 %v580
      %v827 = vunpack.c.h.b16 %v580
      %v828 = vunpack.c.l.b16 %v581
      %v829 = vunpack.c.h.b16 %v581
      %v830 = vunpack.c.l.b16 %v582
      %v831 = vunpack.c.h.b16 %v582
      %v832 = vunpack.c.l.b16 %v583
      %v833 = vunpack.c.h.b16 %v583
      %v834 = vunpack.c.l.b16 %v584
      %v835 = vunpack.c.h.b16 %v584
      %v836 = vunpack.c.l.b16 %v585
      %v837 = vunpack.c.h.b16 %v585
      %v838 = vunpack.c.l.b16 %v586
      %v839 = vunpack.c.h.b16 %v586
      %v840 = vunpack.c.l.b16 %v587
      %v841 = vunpack.c.h.b16 %v587
      %v842 = vunpack.c.l.b16 %v588
      %v843 = vunpack.c.h.b16 %v588
      %v844 = vunpack.c.l.b16 %v589
      %v845 = vunpack.c.h.b16 %v589
      %v846 = vunpack.c.l.b16 %v590
      %v847 = vunpack.c.h.b16 %v590
      %v848 = vunpack.c.l.b16 %v591
      %v849 = vunpack.c.h.b16 %v591
      %v850 = vunpack.c.l.b16 %v592
      %v851 = vunpack.c.h.b16 %v592
      %v852 = vunpack.c.l.b16 %v593
      %v853 = vunpack.c.h.b16 %v593
      %v854 = vunpack.c.l.b16 %v594
      %v855 = vunpack.c.h.b16 %v594
      %v856 = vunpack.c.l.b16 %v595
      %v857 = vunpack.c.h.b16 %v595
      %v858 = vunpack.c.l.b16 %v596
      %v859 = vunpack.c.h.b16 %v596
      %v860 = vunpack.c.l.b16 %v597
      %v861 = vunpack.c.h.b16 %v597
      %v862 = vunpack.c.l.b16 %v598
      %v863 = vunpack.c.h.b16 %v598
      %v864 = vunpack.c.l.b16 %v599
      %v865 = vunpack.c.h.b16 %v599
      %v866 = vunpack.c.l.b16 %v600
      %v867 = vunpack.c.h.b16 %v600
      %v868 = vunpack.c.l.b16 %v601
      %v869 = vunpack.c.h.b16 %v601
      %v870 = vunpack.c.l.b16 %v602
      %v871 = vunpack.c.h.b16 %v602
      %v872 = vunpack.c.l.b16 %v603
      %v873 = vunpack.c.h.b16 %v603
      %v874 = vunpack.c.l.b16 %v604
      %v875 = vunpack.c.h.b16 %v604
      %v876 = vunpack.c.l.b16 %v605
      %v877 = vunpack.c.h.b16 %v605
      %v878 = vunpack.c.l.b16 %v606
      %v879 = vunpack.c.h.b16 %v606
      %v880 = vunpack.c.l.b16 %v607
      %v881 = vunpack.c.h.b16 %v607
      %v882 = vunpack.c.l.b16 %v608
      %v883 = vunpack.c.h.b16 %v608
      %v884 = vunpack.c.l.b16 %v609
      %v885 = vunpack.c.h.b16 %v609
      %v886 = vunpack.c.l.b16 %v610
      %v887 = vunpack.c.h.b16 %v610
      %v888 = vunpack.c.l.b16 %v611
      %v889 = vunpack.c.h.b16 %v611
      %v890 = vunpack.c.l.b16 %v612
      %v891 = vunpack.c.h.b16 %v612
      %v892 = vunpack.c.l.b16 %v613
      %v893 = vunpack.c.h.b16 %v613
      %v894 = vunpack.c.l.b16 %v614
      %v895 = vunpack.c.h.b16 %v614
      %v896 = vunpack.c.l.b16 %v615
      %v897 = vunpack.c.h.b16 %v615
      %v898 = vunpack.c.l.b16 %v616
      %v899 = vunpack.c.h.b16 %v616
      %v900 = vunpack.c.l.b16 %v617
      %v901 = vunpack.c.h.b16 %v617
      %v902 = vunpack.c.l.b16 %v618
      %v903 = vunpack.c.h.b16 %v618
      %v904 = vunpack.c.l.b16 %v619
      %v905 = vunpack.c.h.b16 %v619
      %v906 = vunpack.c.l.b16 %v620
      %v907 = vunpack.c.h.b16 %v620
      %v908 = vunpack.c.l.b16 %v621
      %v909 = vunpack.c.h.b16 %v621
      %v910 = vunpack.c.l.b16 %v622
      %v911 = vunpack.c.h.b16 %v622
      %v912 = vunpack.c.l.b16 %v623
      %v913 = vunpack.c.h.b16 %v623
      %v914 = vunpack.c.l.b16 %v624
      %v915 = vunpack.c.h.b16 %v624
      %v916 = vunpack.c.l.b16 %v625
      %v917 = vunpack.c.h.b16 %v625
      %v918 = vunpack.c.l.b16 %v626
      %v919 = vunpack.c.h.b16 %v626
      %v920 = vunpack.c.l.b16 %v627
      %v921 = vunpack.c.h.b16 %v627
      %v922 = vpack.c.b16 %v728, %v726
      %v923 = vpack.c.b16 %v729, %v727
      %v924 = vpack.c.b16 %v732, %v730
      %v925 = vpack.c.b16 %v733, %v731
      %v926 = vpack.c.b16 %v736, %v734
      %v927 = vpack.c.b16 %v737, %v735
      %v928 = vpack.c.b16 %v740, %v738
      %v929 = vpack.c.b16 %v741, %v739
      %v930 = vpack.c.b16 %v744, %v742
      %v931 = vpack.c.b16 %v745, %v743
      %v932 = vpack.c.b16 %v748, %v746
      %v933 = vpack.c.b16 %v749, %v747
      %v934 = vpack.c.b16 %v752, %v750
      %v935 = vpack.c.b16 %v753, %v751
      %v936 = vpack.c.b16 %v756, %v754
      %v937 = vpack.c.b16 %v757, %v755
      %v938 = vpack.c.b16 %v760, %v758
      %v939 = vpack.c.b16 %v761, %v759
      %v940 = vpack.c.b16 %v764, %v762
      %v941 = vpack.c.b16 %v765, %v763
      %v942 = vpack.c.b16 %v768, %v766
      %v943 = vpack.c.b16 %v769, %v767
      %v944 = vpack.c.b16 %v772, %v770
      %v945 = vpack.c.b16 %v773, %v771
      %v946 = vpack.c.b16 %v776, %v774
      %v947 = vpack.c.b16 %v777, %v775
      %v948 = vpack.c.b16 %v780, %v778
      %v949 = vpack.c.b16 %v781, %v779
      %v950 = vpack.c.b16 %v784, %v782
      %v951 = vpack.c.b16 %v785, %v783
      %v952 = vpack.c.b16 %v788, %v786
      %v953 = vpack.c.b16 %v789, %v787
      %v954 = vpack.c.b16 %v792, %v790
      %v955 = vpack.c.b16 %v793, %v791
      %v956 = vpack.c.b16 %v796, %v794
      %v957 = vpack.c.b16 %v797, %v795
      %v958 = vpack.c.b16 %v800, %v798
      %v959 = vpack.c.b16 %v801, %v799
      %v960 = vpack.c.b16 %v804, %v802
      %v961 = vpack.c.b16 %v805, %v803
      %v962 = vpack.c.b16 %v808, %v806
      %v963 = vpack.c.b16 %v809, %v807
      %v964 = vpack.c.b16 %v812, %v810
      %v965 = vpack.c.b16 %v813, %v811
      %v966 = vpack.c.b16 %v816, %v814
      %v967 = vpack.c.b16 %v817, %v815
      %v968 = vpack.c.b16 %v820, %v818
      %v969 = vpack.c.b16 %v821, %v819
      %v970 = vpack.c.b16 %v824, %v822
      %v971 = vpack.c.b16 %v825, %v823
      %v972 = vpack.c.b16 %v828, %v826
      %v973 = vpack.c.b16 %v829, %v827
      %v974 = vpack.c.b16 %v832, %v830
      %v975 = vpack.c.b16 %v833, %v831
      %v976 = vpack.c.b16 %v836, %v834
      %v977 = vpack.c.b16 %v837, %v835
      %v978 = vpack.c.b16 %v840, %v838
      %v979 = vpack.c.b16 %v841, %v839
      %v980 = vpack.c.b16 %v844, %v842
      %v981 = vpack.c.b16 %v845, %v843
      %v982 = vpack.c.b16 %v848, %v846
      %v983 = vpack.c.b16 %v849, %v847
      %v984 = vpack.c.b16 %v852, %v850
      %v985 = vpack.c.b16 %v853, %v851
      %v986 = vpack.c.b16 %v856, %v854
      %v987 = vpack.c.b16 %v857, %v855
      %v988 = vpack.c.b16 %v860, %v858
      %v989 = vpack.c.b16 %v861, %v859
      %v990 = vpack.c.b16 %v864, %v862
      %v991 = vpack.c.b16 %v865, %v863
      %v992 = vpack.c.b16 %v868, %v866
      %v993 = vpack.c.b16 %v869, %v867
      %v994 = vpack.c.b16 %v872, %v870
      %v995 = vpack.c.b16 %v873, %v871
      %v996 = vpack.c.b16 %v876, %v874
      %v997 = vpack.c.b16 %v877, %v875
      %v998 = vpack.c.b16 %v880, %v878
      %v999 = vpack.c.b16 %v881, %v879
      %v1000 = vpack.c.b16 %v884, %v882
      %v1001 = vpack.c.b16 %v885, %v883
      %v1002 = vpack.c.b16 %v888, %v886
      %v1003 = vpack.c.b16 %v889, %v887
      %v1004 = vpack.c.b16 %v892, %v890
      %v1005 = vpack.c.b16 %v893, %v891
      %v1006 = vpack.c.b16 %v896, %v894
      %v1007 = vpack.c.b16 %v897, %v895
      %v1008 = vpack.c.b16 %v900, %v898
      %v1009 = vpack.c.b16 %v901, %v899
      %v1010 = vpack.c.b16 %v904, %v902
      %v1011 = vpack.c.b16 %v905, %v903
      %v1012 = vpack.c.b16 %v908, %v906
      %v1013 = vpack.c.b16 %v909, %v907
      %v1014 = vpack.c.b16 %v912, %v910
      %v1015 = vpack.c.b16 %v913, %v911
      %v1016 = vpack.c.b16 %v916, %v914
      %v1017 = vpack.c.b16 %v917, %v915
      %v1018 = vpack.c.b16 %v920, %v918
      %v1019 = vpack.c.b16 %v921, %v919
      %vm1118 = vcmask 130048
      %v1120 = vsel %vm1118, %v529, 0
      %1122 = vmatprep.subr.bf16.mxu0 %v923
      %1123 = vmatpush1.bf16.msra.mxu0 %v922
      %1124 = vmatprep.subr.bf16.mxu0 %v925
      %1125 = vmatpush1.bf16.msra.mxu0 %v924
      %1126 = vmatprep.subr.bf16.mxu0 %v927
      %1127 = vmatpush1.bf16.msra.mxu0 %v926
      %1128 = vmatprep.subr.bf16.mxu0 %v929
      %1129 = vmatpush1.bf16.msra.mxu0 %v928
      %1130 = vmatprep.subr.bf16.mxu0 %v931
      %1131 = vmatpush1.bf16.msra.mxu0 %v930
      %1132 = vmatprep.subr.bf16.mxu0 %v933
      %1133 = vmatpush1.bf16.msra.mxu0 %v932
      %1134 = vmatprep.subr.bf16.mxu0 %v935
      %1135 = vmatpush1.bf16.msra.mxu0 %v934
      %1136 = vmatprep.subr.bf16.mxu0 %v937
      %1137 = vmatpush1.bf16.msra.mxu0 %v936
      %1138 = vmatprep.subr.bf16.mxu0 %v939
      %1139 = vmatpush1.bf16.msra.mxu0 %v938
      %1140 = vmatprep.subr.bf16.mxu0 %v941
      %1141 = vmatpush1.bf16.msra.mxu0 %v940
      %1142 = vmatprep.subr.bf16.mxu0 %v943
      %1143 = vmatpush1.bf16.msra.mxu0 %v942
      %1144 = vmatprep.subr.bf16.mxu0 %v945
      %1145 = vmatpush1.bf16.msra.mxu0 %v944
      %1146 = vmatprep.subr.bf16.mxu0 %v947
      %1147 = vmatpush1.bf16.msra.mxu0 %v946
      %1148 = vmatprep.subr.bf16.mxu0 %v949
      %1149 = vmatpush1.bf16.msra.mxu0 %v948
      %1150 = vmatprep.subr.bf16.mxu0 %v951
      %1151 = vmatpush1.bf16.msra.mxu0 %v950
      %1152 = vmatprep.subr.bf16.mxu0 %v953
      %1153 = vmatpush1.bf16.msra.mxu0 %v952
      %1154 = vmatprep.mubr.bf16.mxu0 %v524
      %1155 = vmatmul.mubr.bf16.gmra.mrb[0].mxu0 %v523
      %v1156 = vpop.f32.mrb[0].mxu0
      %v1157 = vadd.f32 0.0, %v1156
      %v1158 = vpop.f32.mrb[0].mxu0
      %v1159 = vadd.f32 0.0, %v1158
      %v1160 = vpop.f32.mrb[0].mxu0
      %v1161 = vpop.f32.mrb[0].mxu0
      %1162 = vdwg.mxu0
      %1163 = vmatprep.subr.bf16.mxu0 %v955
      %1164 = vmatpush1.bf16.msra.mxu0 %v954
      %1165 = vmatprep.subr.bf16.mxu0 %v957
      %1166 = vmatpush1.bf16.msra.mxu0 %v956
      %1167 = vmatprep.subr.bf16.mxu0 %v959
      %1168 = vmatpush1.bf16.msra.mxu0 %v958
      %1169 = vmatprep.subr.bf16.mxu0 %v961
      %1170 = vmatpush1.bf16.msra.mxu0 %v960
      %1171 = vmatprep.subr.bf16.mxu0 %v963
      %1172 = vmatpush1.bf16.msra.mxu0 %v962
      %1173 = vmatprep.subr.bf16.mxu0 %v965
      %1174 = vmatpush1.bf16.msra.mxu0 %v964
      %1175 = vmatprep.subr.bf16.mxu0 %v967
      %1176 = vmatpush1.bf16.msra.mxu0 %v966
      %1177 = vmatprep.subr.bf16.mxu0 %v969
      %1178 = vmatpush1.bf16.msra.mxu0 %v968
      %1179 = vmatprep.subr.bf16.mxu0 %v971
      %1180 = vmatpush1.bf16.msra.mxu0 %v970
      %1181 = vmatprep.subr.bf16.mxu0 %v973
      %1182 = vmatpush1.bf16.msra.mxu0 %v972
      %1183 = vmatprep.subr.bf16.mxu0 %v975
      %1184 = vmatpush1.bf16.msra.mxu0 %v974
      %1185 = vmatprep.subr.bf16.mxu0 %v977
      %1186 = vmatpush1.bf16.msra.mxu0 %v976
      %1187 = vmatprep.subr.bf16.mxu0 %v979
      %1188 = vmatpush1.bf16.msra.mxu0 %v978
      %1189 = vmatprep.subr.bf16.mxu0 %v981
      %1190 = vmatpush1.bf16.msra.mxu0 %v980
      %1191 = vmatprep.subr.bf16.mxu0 %v983
      %1192 = vmatpush1.bf16.msra.mxu0 %v982
      %1193 = vmatprep.subr.bf16.mxu0 %v985
      %1194 = vmatpush1.bf16.msra.mxu0 %v984
      %1195 = vmatprep.mubr.bf16.mxu0 %v526
      %1196 = vmatmul.mubr.bf16.gmra.mrb[0].mxu0 %v525
      %v1197 = vpop.f32.mrb[0].mxu0
      %v1198 = vadd.f32 %v1157, %v1197
      %v1199 = vpop.f32.mrb[0].mxu0
      %v1200 = vadd.f32 %v1159, %v1199
      %v1201 = vpop.f32.mrb[0].mxu0
      %v1202 = vpop.f32.mrb[0].mxu0
      %1203 = vdwg.mxu0
      %1204 = vmatprep.subr.bf16.mxu0 %v987
      %1205 = vmatpush1.bf16.msra.mxu0 %v986
      %1206 = vmatprep.subr.bf16.mxu0 %v989
      %1207 = vmatpush1.bf16.msra.mxu0 %v988
      %1208 = vmatprep.subr.bf16.mxu0 %v991
      %1209 = vmatpush1.bf16.msra.mxu0 %v990
      %1210 = vmatprep.subr.bf16.mxu0 %v993
      %1211 = vmatpush1.bf16.msra.mxu0 %v992
      %1212 = vmatprep.subr.bf16.mxu0 %v995
      %1213 = vmatpush1.bf16.msra.mxu0 %v994
      %1214 = vmatprep.subr.bf16.mxu0 %v997
      %1215 = vmatpush1.bf16.msra.mxu0 %v996
      %1216 = vmatprep.subr.bf16.mxu0 %v999
      %1217 = vmatpush1.bf16.msra.mxu0 %v998
      %1218 = vmatprep.subr.bf16.mxu0 %v1001
      %1219 = vmatpush1.bf16.msra.mxu0 %v1000
      %1220 = vmatprep.subr.bf16.mxu0 %v1003
      %1221 = vmatpush1.bf16.msra.mxu0 %v1002
      %1222 = vmatprep.subr.bf16.mxu0 %v1005
      %1223 = vmatpush1.bf16.msra.mxu0 %v1004
      %1224 = vmatprep.subr.bf16.mxu0 %v1007
      %1225 = vmatpush1.bf16.msra.mxu0 %v1006
      %1226 = vmatprep.subr.bf16.mxu0 %v1009
      %1227 = vmatpush1.bf16.msra.mxu0 %v1008
      %1228 = vmatprep.subr.bf16.mxu0 %v1011
      %1229 = vmatpush1.bf16.msra.mxu0 %v1010
      %1230 = vmatprep.subr.bf16.mxu0 %v1013
      %1231 = vmatpush1.bf16.msra.mxu0 %v1012
      %1232 = vmatprep.subr.bf16.mxu0 %v1015
      %1233 = vmatpush1.bf16.msra.mxu0 %v1014
      %1234 = vmatprep.subr.bf16.mxu0 %v1017
      %1235 = vmatpush1.bf16.msra.mxu0 %v1016
      %1236 = vmatprep.mubr.bf16.mxu0 %v528
      %1237 = vmatmul.mubr.bf16.gmra.mrb[0].mxu0 %v527
      %v1238 = vpop.f32.mrb[0].mxu0
      %v1239 = vadd.f32 %v1198, %v1238
      %v1240 = vpop.f32.mrb[0].mxu0
      %v1241 = vadd.f32 %v1200, %v1240
      %v1242 = vpop.f32.mrb[0].mxu0
      %v1243 = vpop.f32.mrb[0].mxu0
      %1244 = vdwg.mxu0
      %1245 = vmatprep.subr.bf16.mxu0 %v1019
      %1246 = vmatpush1.bf16.msra.mxu0 %v1018
      %1247 = vmatprep.subr.bf16.mxu0 0
      %1248 = vmatpush1.bf16.msra.mxu0 0
      %1249 = vmatprep.subr.bf16.mxu0 0
      %1250 = vmatpush1.bf16.msra.mxu0 0
      %1251 = vmatprep.subr.bf16.mxu0 0
      %1252 = vmatpush1.bf16.msra.mxu0 0
      %1253 = vmatprep.subr.bf16.mxu0 0
      %1254 = vmatpush1.bf16.msra.mxu0 0
      %1255 = vmatprep.subr.bf16.mxu0 0
      %1256 = vmatpush1.bf16.msra.mxu0 0
      %1257 = vmatprep.subr.bf16.mxu0 0
      %1258 = vmatpush1.bf16.msra.mxu0 0
      %1259 = vmatprep.subr.bf16.mxu0 0
      %1260 = vmatpush1.bf16.msra.mxu0 0
      %1261 = vmatprep.subr.bf16.mxu0 0
      %1262 = vmatpush1.bf16.msra.mxu0 0
      %1263 = vmatprep.subr.bf16.mxu0 0
      %1264 = vmatpush1.bf16.msra.mxu0 0
      %1265 = vmatprep.subr.bf16.mxu0 0
      %1266 = vmatpush1.bf16.msra.mxu0 0
      %1267 = vmatprep.subr.bf16.mxu0 0
      %1268 = vmatpush1.bf16.msra.mxu0 0
      %1269 = vmatprep.subr.bf16.mxu0 0
      %1270 = vmatpush1.bf16.msra.mxu0 0
      %1271 = vmatprep.subr.bf16.mxu0 0
      %1272 = vmatpush1.bf16.msra.mxu0 0
      %1273 = vmatprep.subr.bf16.mxu0 0
      %1274 = vmatpush1.bf16.msra.mxu0 0
      %1275 = vmatprep.subr.bf16.mxu0 0
      %1276 = vmatpush1.bf16.msra.mxu0 0
      %1277 = vmatprep.mubr.bf16.mxu0 0
      %1278 = vmatmul.mubr.bf16.gmra.mrb[0].mxu0 %v1120
      %v1279 = vpop.f32.mrb[0].mxu0
      %v1280 = vadd.f32 %v1239, %v1279
      %v1281 = vpop.f32.mrb[0].mxu0
      %v1282 = vadd.f32 %v1241, %v1281
      %v1283 = vpop.f32.mrb[0].mxu0
      %v1284 = vpop.f32.mrb[0].mxu0
      %1285 = vdwg.mxu0
      %1286 = vst [vmem:[%s170] sm:$0x3f] %v1280
      %vm1287 = vcmask 553984
      %1288 = vst.msk [vmem:[%s170 + $0x8] sm:$0x3f] %vm1287, %v1282
      %p1289 = scmp.lt.s32.totalorder %s14, 1
      %s1290 = scalar_select %p1289, %s14, 1
      %s1291 = smul.addr %s1290, 2
      %s1292 = smul.addr %s1291, 8
      %s1293 = scalar_lea.vmem %s3, %s1292
      // Predicated region
      $region33: #{cnn_lenet_forward.3} parent=31 // pred_check
        %p1294 = pneg %p100
      $region34: #{cnn_lenet_forward.3} parent=31 // pred_check_branch
        %1296 = sbr.rel (%p1294) target = $region36
      $region35: #{cnn_lenet_forward.3} parent=31 // pred_region
        _
      $region36: #{cnn_lenet_forward.3} parent=31 // pred_fallthru
        _
    $region32: #{cnn_lenet_forward.3} parent=5 // pred_fallthru
      _
    %p1297 = scmp.le.s32.totalorder 2, %s9
    // Predicated region
    $region37: #{cnn_lenet_forward.3} parent=5 // pred_check
      %p1298 = pneg %p1297
    $region38: #{cnn_lenet_forward.3} parent=5 // pred_check_branch
      %1300 = sbr.rel (%p1298) target = $region40
    $region39: #{cnn_lenet_forward.3} parent=5 // pred_region
      %s1301 = ssub.s32 %s9, 2
      // Predicated region
      $region41: #{cnn_lenet_forward.3} parent=39 // pred_check
        %p1302 = pneg %p106
      $region42: #{cnn_lenet_forward.3} parent=39 // pred_check_branch
        %1304 = sbr.rel (%p1302) target = $region44
      $region43: #{cnn_lenet_forward.3} parent=39 // pred_region
        %p1305 = scmp.lt.s32.totalorder %s15, 1
        %s1306 = scalar_select %p1305, %s15, 1
        %s1307 = smul.addr %s1306, 2
        %s1308 = smul.addr %s1307, 8
        %s1309 = scalar_lea.vmem %s3, %s1308
      $region44: #{cnn_lenet_forward.3} parent=39 // pred_fallthru
        _
    $region40: #{cnn_lenet_forward.3} parent=5 // pred_fallthru
      _
  $region6: #{cnn_lenet_forward.3} parent=0 // loop_footer
    %s13 = sadd.s32 1, %s9
  $region7: #{cnn_lenet_forward.3} parent=0 // loop_footer_branch
    %8 = sbr.rel target = $region3
  $region8: #{cnn_lenet_forward.3} parent=0 // loop_exit
    _

// kernel: cnn_lenet_forward.4
$region0: #{cnn_lenet_forward.4}
  #allocation0 [shape = 'u32[]', space=smem, size = 0x4, offset = 0x4, fixed_abs, tag = 'smem constant byte address 0x4 - core index']
  #allocation1 [shape = 'u32[144,128]{1,0:T(1,128)}', space=vmem, size = 0x12000, scoped, tag = 'internal scratch']
  %s0 = inlined_call_operand.vmem [shape: bf16[2,150,100], index: 0, kind: input, shape index: {}]
  %s1 = inlined_call_operand.vmem [shape: bf16[16,150], index: 1, kind: input, shape index: {}]
  %s2 = inlined_call_operand.vmem [shape: bf16[100,25], index: 2, kind: input, shape index: {}]
  %s3 = inlined_call_operand.vmem [shape: f32[2,16,25], index: 3, kind: output, shape index: {}]
  %s4 = sld [smem:[#allocation0]]
  $region45: #{cnn_lenet_forward.4} parent=0
    _
  %s6 = ssub.s32 1, %s4
  %s7 = scalar_select 0, %s6, %s4
  loop: start=0, step=1, limit=4
  $region2: #{cnn_lenet_forward.4} parent=0 // loop_pre_header
    _
  $region3: #{cnn_lenet_forward.4} parent=0 // loop_header
    %s9 = sphi 0, %s13
    %p10 = scmp.ge.s32.totalorder %s9, 4
    %s19 = sphi 0, %s21
    %s22 = sphi 0, %s19
    %s23 = sphi 0, %s22
    %s39 = sphi 0, %s23
    %s43 = sphi 0, %s43
    %s45 = sphi 0, %s43
    %s46 = sphi 0, %s45
    %s60 = sphi 0, %s46
    %s64 = sphi 0, %s64
    %s66 = sphi 0, %s64
    %s67 = sphi 0, %s66
    %s81 = sphi 0, %s67
    %s87 = sphi 0, %s89
    %s90 = sphi 0, %s87
    %s91 = sphi 0, %s90
    %s107 = sphi 0, %s91
  $region4: #{cnn_lenet_forward.4} parent=0 // loop_header_branch
    %12 = sbr.rel (%p10) target = $region8
  $region5: #{cnn_lenet_forward.4} parent=0 // loop_body
    %s14 = ssub.s32 %s9, 1
    %s15 = ssub.s32 %s9, 2
    %s16 = sadd.s32 %s9, 1
    %s17 = ssub.s32 %s9, %s16
    %p18 = scmp.eq.s32.totalorder %s17, 0
    %s20 = sadd.s32 %s19, 1
    %s21 = scalar_select %p18, %s19, %s20
    %p24 = pneg %p18
    %p25 = scmp.eq.s32.totalorder %s9, 1
    %p26 = por %p24, %p25
    %p27 = scmp.ne.s32.totalorder %s19, %s22
    %p28 = scmp.eq.s32.totalorder %s9, 0
    %p29 = por %p27, %p28
    %p30 = scmp.ne.s32.totalorder %s19, %s22
    %p31 = scmp.eq.s32.totalorder %s14, 1
    %p32 = por %p30, %p31
    %p33 = scmp.ne.s32.totalorder %s22, %s23
    %p34 = scmp.eq.s32.totalorder %s14, 0
    %p35 = por %p33, %p34
    %p36 = scmp.ne.s32.totalorder %s22, %s23
    %p37 = scmp.eq.s32.totalorder %s15, 1
    %p38 = por %p36, %p37
    %p40 = scmp.ne.s32.totalorder %s23, %s39
    %p41 = scmp.eq.s32.totalorder %s15, 0
    %p42 = por %p40, %p41
    %s44 = sadd.s32 %s43, 1
    %p47 = scmp.eq.s32.totalorder %s9, 1
    %p48 = scmp.ne.s32.totalorder %s43, %s45
    %p49 = scmp.eq.s32.totalorder %s9, 0
    %p50 = por %p48, %p49
    %p51 = scmp.ne.s32.totalorder %s43, %s45
    %p52 = scmp.eq.s32.totalorder %s14, 1
    %p53 = por %p51, %p52
    %p54 = scmp.ne.s32.totalorder %s45, %s46
    %p55 = scmp.eq.s32.totalorder %s14, 0
    %p56 = por %p54, %p55
    %p57 = scmp.ne.s32.totalorder %s45, %s46
    %p58 = scmp.eq.s32.totalorder %s15, 1
    %p59 = por %p57, %p58
    %p61 = scmp.ne.s32.totalorder %s46, %s60
    %p62 = scmp.eq.s32.totalorder %s15, 0
    %p63 = por %p61, %p62
    %s65 = sadd.s32 %s64, 1
    %p68 = scmp.eq.s32.totalorder %s9, 1
    %p69 = scmp.ne.s32.totalorder %s64, %s66
    %p70 = scmp.eq.s32.totalorder %s9, 0
    %p71 = por %p69, %p70
    %p72 = scmp.ne.s32.totalorder %s64, %s66
    %p73 = scmp.eq.s32.totalorder %s14, 1
    %p74 = por %p72, %p73
    %p75 = scmp.ne.s32.totalorder %s66, %s67
    %p76 = scmp.eq.s32.totalorder %s14, 0
    %p77 = por %p75, %p76
    %p78 = scmp.ne.s32.totalorder %s66, %s67
    %p79 = scmp.eq.s32.totalorder %s15, 1
    %p80 = por %p78, %p79
    %p82 = scmp.ne.s32.totalorder %s67, %s81
    %p83 = scmp.eq.s32.totalorder %s15, 0
    %p84 = por %p82, %p83
    %s85 = ssub.s32 %s9, %s16
    %p86 = scmp.eq.s32.totalorder %s85, 0
    %s88 = sadd.s32 %s87, 1
    %s89 = scalar_select %p86, %s87, %s88
    %p92 = pneg %p86
    %p93 = scmp.eq.s32.totalorder %s9, 1
    %p94 = por %p92, %p93
    %p95 = scmp.ne.s32.totalorder %s87, %s90
    %p96 = scmp.eq.s32.totalorder %s9, 0
    %p97 = por %p95, %p96
    %p98 = scmp.ne.s32.totalorder %s87, %s90
    %p99 = scmp.eq.s32.totalorder %s14, 1
    %p100 = por %p98, %p99
    %p101 = scmp.ne.s32.totalorder %s90, %s91
    %p102 = scmp.eq.s32.totalorder %s14, 0
    %p103 = por %p101, %p102
    %p104 = scmp.ne.s32.totalorder %s90, %s91
    %p105 = scmp.eq.s32.totalorder %s15, 1
    %p106 = por %p104, %p105
    %p108 = scmp.ne.s32.totalorder %s91, %s107
    %p109 = scmp.eq.s32.totalorder %s15, 0
    %p110 = por %p108, %p109
    %p111 = scmp.le.s32.totalorder 1, %s9
    %p112 = scmp.lt.s32.totalorder %s9, 3
    %p113 = pnand %p111, %p112
    %p114 = pneg %p113
    // Predicated region
    $region9: #{cnn_lenet_forward.4} parent=5 // pred_check
      _
    $region10: #{cnn_lenet_forward.4} parent=5 // pred_check_branch
      %116 = sbr.rel (%p113) target = $region12
    $region11: #{cnn_lenet_forward.4} parent=5 // pred_region
      %s117 = ssub.s32 %s9, 1
      // Predicated region
      $region13: #{cnn_lenet_forward.4} parent=11 // pred_check
        %p118 = pneg %p56
      $region14: #{cnn_lenet_forward.4} parent=11 // pred_check_branch
        %120 = sbr.rel (%p118) target = $region16
      $region15: #{cnn_lenet_forward.4} parent=11 // pred_region
        _
      $region16: #{cnn_lenet_forward.4} parent=11 // pred_fallthru
        _
      // Predicated region
      $region17: #{cnn_lenet_forward.4} parent=11 // pred_check
        %p121 = pneg %p77
      $region18: #{cnn_lenet_forward.4} parent=11 // pred_check_branch
        %123 = sbr.rel (%p121) target = $region20
      $region19: #{cnn_lenet_forward.4} parent=11 // pred_region
        _
      $region20: #{cnn_lenet_forward.4} parent=11 // pred_fallthru
        _
    $region12: #{cnn_lenet_forward.4} parent=5 // pred_fallthru
      _
    %p124 = scmp.lt.s32.totalorder %s9, 2
    // Predicated region
    $region21: #{cnn_lenet_forward.4} parent=5 // pred_check
      %p125 = pneg %p124
    $region22: #{cnn_lenet_forward.4} parent=5 // pred_check_branch
      %127 = sbr.rel (%p125) target = $region24
    $region23: #{cnn_lenet_forward.4} parent=5 // pred_region
      // Predicated region
      $region25: #{cnn_lenet_forward.4} parent=23 // pred_check
        %p128 = pneg %p29
      $region26: #{cnn_lenet_forward.4} parent=23 // pred_check_branch
        %130 = sbr.rel (%p128) target = $region28
      $region27: #{cnn_lenet_forward.4} parent=23 // pred_region
        %p131 = scmp.lt.s32.totalorder %s9, 1
        %s132 = scalar_select %p131, %s9, 1
        %s133 = smul.addr %s132, 19
        %s134 = smul.addr %s133, 4
        %s135 = scalar_lea.vmem %s0, %s134
      $region28: #{cnn_lenet_forward.4} parent=23 // pred_fallthru
        _
    $region24: #{cnn_lenet_forward.4} parent=5 // pred_fallthru
      _
    %p136 = scmp.le.s32.totalorder 1, %s9
    %p137 = scmp.lt.s32.totalorder %s9, 3
    %p138 = pnand %p136, %p137
    %p139 = pneg %p138
    // Predicated region
    $region29: #{cnn_lenet_forward.4} parent=5 // pred_check
      _
    $region30: #{cnn_lenet_forward.4} parent=5 // pred_check_branch
      %141 = sbr.rel (%p138) target = $region32
    $region31: #{cnn_lenet_forward.4} parent=5 // pred_region
      %s142 = ssub.s32 %s9, 1
      %p143 = scmp.lt.s32.totalorder %s14, 1
      %s144 = scalar_select %p143, %s14, 1
      %s145 = smul.addr %s144, 19
      %s146 = smul.addr %s145, 4
      %s147 = scalar_lea.vmem %s0, %s146
      %p148 = pneg %p35
      %p149 = pneg %p32
      %p150 = pneg %p56
      %p151 = pneg %p53
      %p152 = pneg %p77
      %p153 = pneg %p74
      %p154 = pneg %p103
      %p155 = pneg %p100
      %p156 = scmp.lt.s32.totalorder %s14, 1
      %s157 = scalar_select %p156, %s14, 1
      %s158 = smul.addr %s157, 2
      %s159 = smul.addr %s158, 8
      %s160 = scalar_lea.vmem %s3, %s159
      %p161 = scmp.lt.s32.totalorder %s14, 1
      %s162 = scalar_select %p161, %s14, 1
      %s163 = smul.addr %s162, 19
      %s164 = smul.addr %s163, 4
      %s165 = scalar_lea.vmem %s0, %s164
      %p166 = scmp.lt.s32.totalorder %s14, 1
      %s167 = scalar_select %p166, %s14, 1
      %s168 = smul.addr %s167, 2
      %s169 = smul.addr %s168, 8
      %s170 = scalar_lea.vmem %s3, %s169
      %v172 = vld [vmem:[%s1] sm:$0xff]
      %v173 = vld [vmem:[%s1 + $0x8] sm:$0xff]
      %v174 = vld [vmem:[%s165] sm:$0xf]
      %v175 = vld [vmem:[%s165 + $0x4] sm:$0xf]
      %v176 = vld [vmem:[%s165 + $0x8] sm:$0xf]
      %v177 = vld [vmem:[%s165 + $0xc] sm:$0xf]
      %v178 = vld [vmem:[%s165 + $0x10] sm:$0xf]
      %v179 = vld [vmem:[%s165 + $0x14] sm:$0xf]
      %v180 = vld [vmem:[%s165 + $0x18] sm:$0xf]
      %v181 = vld [vmem:[%s165 + $0x1c] sm:$0xf]
      %v182 = vld [vmem:[%s165 + $0x20] sm:$0xf]
      %v183 = vld [vmem:[%s165 + $0x24] sm:$0xf]
      %v184 = vld [vmem:[%s165 + $0x28] sm:$0xf]
      %v185 = vld [vmem:[%s165 + $0x2c] sm:$0xf]
      %v186 = vld [vmem:[%s165 + $0x30] sm:$0xf]
      %v187 = vld [vmem:[%s165 + $0x34] sm:$0xf]
      %v188 = vld [vmem:[%s165 + $0x38] sm:$0xf]
      %v189 = vld [vmem:[%s165 + $0x3c] sm:$0xf]
      %v190 = vld [vmem:[%s165 + $0x40] sm:$0xf]
      %v191 = vld [vmem:[%s165 + $0x44] sm:$0xf]
      %v192 = vld [vmem:[%s165 + $0x48] sm:$0x7]
      %v195 = vunpack.c.l.b16 %v172
      %v196 = vunpack.c.h.b16 %v172
      %v197 = vunpack.c.l.b16 %v173
      %v198 = vunpack.c.h.b16 %v173
      %v199 = vpack.c.b16 %v197, %v195
      %v200 = vpack.c.b16 %v198, %v196
      %v221 = vunpack.c.l.b16 %v174
      %v222 = vunpack.c.l.b16 %v175
      %v223 = vunpack.c.l.b16 %v176
      %v224 = vunpack.c.l.b16 %v177
      %v225 = vunpack.c.l.b16 %v178
      %v226 = vunpack.c.l.b16 %v179
      %v227 = vunpack.c.l.b16 %v180
      %v228 = vunpack.c.l.b16 %v181
      %v229 = vunpack.c.l.b16 %v182
      %v230 = vunpack.c.l.b16 %v183
      %v231 = vunpack.c.l.b16 %v184
      %v232 = vunpack.c.l.b16 %v185
      %v233 = vunpack.c.l.b16 %v186
      %v234 = vunpack.c.l.b16 %v187
      %v235 = vunpack.c.l.b16 %v188
      %v236 = vunpack.c.l.b16 %v189
      %v237 = vunpack.c.l.b16 %v190
      %v238 = vunpack.c.l.b16 %v191
      %v239 = vunpack.c.l.b16 %v192
      %v240 = vpack.c.b16 %v222, %v221
      %v241 = vpack.c.b16 %v224, %v223
      %v242 = vpack.c.b16 %v226, %v225
      %v243 = vpack.c.b16 %v228, %v227
      %v244 = vpack.c.b16 %v230, %v229
      %v245 = vpack.c.b16 %v232, %v231
      %v246 = vpack.c.b16 %v234, %v233
      %v247 = vpack.c.b16 %v236, %v235
      %v248 = vpack.c.b16 %v238, %v237
      %v249 = vpack.c.b16 %v239, %v239
      %vm259 = vcmask 179200
      %v261 = vsel %vm259, %v200, 0
      %vm263 = vcmask 1042432
      %v265 = vsel %vm263, %v249, 0
      %267 = vmatprep.subr.bf16.mxu0 0
      %268 = vmatpush1.bf16.msra.mxu0 %v240
      %269 = vmatprep.subr.bf16.mxu0 0
      %270 = vmatpush1.bf16.msra.mxu0 %v241
      %271 = vmatprep.subr.bf16.mxu0 0
      %272 = vmatpush1.bf16.msra.mxu0 %v242
      %273 = vmatprep.subr.bf16.mxu0 0
      %274 = vmatpush1.bf16.msra.mxu0 %v243
      %275 = vmatprep.subr.bf16.mxu0 0
      %276 = vmatpush1.bf16.msra.mxu0 %v244
      %277 = vmatprep.subr.bf16.mxu0 0
      %278 = vmatpush1.bf16.msra.mxu0 %v245
      %279 = vmatprep.subr.bf16.mxu0 0
      %280 = vmatpush1.bf16.msra.mxu0 %v246
      %281 = vmatprep.subr.bf16.mxu0 0
      %282 = vmatpush1.bf16.msra.mxu0 %v247
      %283 = vmatprep.subr.bf16.mxu0 0
      %284 = vmatpush1.bf16.msra.mxu0 %v248
      %285 = vmatprep.subr.bf16.mxu0 0
      %286 = vmatpush1.bf16.msra.mxu0 %v265
      %287 = vmatprep.subr.bf16.mxu0 0
      %288 = vmatpush1.bf16.msra.mxu0 0
      %289 = vmatprep.subr.bf16.mxu0 0
      %290 = vmatpush1.bf16.msra.mxu0 0
      %291 = vmatprep.subr.bf16.mxu0 0
      %292 = vmatpush1.bf16.msra.mxu0 0
      %293 = vmatprep.subr.bf16.mxu0 0
      %294 = vmatpush1.bf16.msra.mxu0 0
      %295 = vmatprep.subr.bf16.mxu0 0
      %296 = vmatpush1.bf16.msra.mxu0 0
      %297 = vmatprep.subr.bf16.mxu0 0
      %298 = vmatpush1.bf16.msra.mxu0 0
      %299 = vmatprep.mubr.bf16.mxu0 %v261
      %300 = vmatmul.mubr.bf16.gmra.mrb[0].mxu0 %v199
      %v301 = vpop.f32.mrb[0].mxu0
      %v302 = vadd.f32 0.0, %v301
      %v303 = vpop.f32.mrb[0].mxu0
      %v304 = vpop.f32.mrb[0].mxu0
      %v305 = vadd.f32 0.0, %v304
      %v306 = vpop.f32.mrb[0].mxu0
      %307 = vdwg.mxu0
      %v308 = vmax.f32 %v302, 0.0
      %v309 = vmax.f32 %v305, 0.0
      %v310 = vpack.c.bf16 %v309, %v308
      %v311 = vld [vmem:[%s2] sm:$0xf]
      %v312 = vld [vmem:[%s2 + $0x4] sm:$0xf]
      %v313 = vld [vmem:[%s2 + $0x8] sm:$0xf]
      %v314 = vld [vmem:[%s2 + $0xc] sm:$0xf]
      %v315 = vld [vmem:[%s2 + $0x10] sm:$0xf]
      %v316 = vld [vmem:[%s2 + $0x14] sm:$0xf]
      %v317 = vld [vmem:[%s2 + $0x18] sm:$0xf]
      %v318 = vld [vmem:[%s2 + $0x1c] sm:$0xf]
      %v319 = vld [vmem:[%s2 + $0x20] sm:$0xf]
      %v320 = vld [vmem:[%s2 + $0x24] sm:$0xf]
      %v321 = vld [vmem:[%s2 + $0x28] sm:$0xf]
      %v322 = vld [vmem:[%s2 + $0x2c] sm:$0xf]
      %v323 = vld [vmem:[%s2 + $0x30] sm:$0x3]
      %v337 = vunpack.c.l.b16 %v311
      %v338 = vunpack.c.l.b16 %v312
      %v339 = vunpack.c.l.b16 %v313
      %v340 = vunpack.c.l.b16 %v314
      %v341 = vunpack.c.l.b16 %v315
      %v342 = vunpack.c.l.b16 %v316
      %v343 = vunpack.c.l.b16 %v317
      %v344 = vunpack.c.l.b16 %v318
      %v345 = vunpack.c.l.b16 %v319
      %v346 = vunpack.c.l.b16 %v320
      %v347 = vunpack.c.l.b16 %v321
      %v348 = vunpack.c.l.b16 %v322
      %v349 = vunpack.c.l.b16 %v323
      %v350 = vpack.c.b16 %v338, %v337
      %v351 = vpack.c.b16 %v340, %v339
      %v352 = vpack.c.b16 %v342, %v341
      %v353 = vpack.c.b16 %v344, %v343
      %v354 = vpack.c.b16 %v346, %v345
      %v355 = vpack.c.b16 %v348, %v347
      %v356 = vpack.c.b16 %v349, %v349
      %vm363 = vcmask 818176
      %v365 = vsel %vm363, %v310, 0
      %vm367 = vcmask 1041408
      %v369 = vsel %vm367, %v356, 0
      %371 = vmatprep.subr.bf16.mxu0 0
      %372 = vmatpush1.bf16.msra.mxu0 %v350
      %373 = vmatprep.subr.bf16.mxu0 0
      %374 = vmatpush1.bf16.msra.mxu0 %v351
      %375 = vmatprep.subr.bf16.mxu0 0
      %376 = vmatpush1.bf16.msra.mxu0 %v352
      %377 = vmatprep.subr.bf16.mxu0 0
      %378 = vmatpush1.bf16.msra.mxu0 %v353
      %379 = vmatprep.subr.bf16.mxu0 0
      %380 = vmatpush1.bf16.msra.mxu0 %v354
      %381 = vmatprep.subr.bf16.mxu0 0
      %382 = vmatpush1.bf16.msra.mxu0 %v355
      %383 = vmatprep.subr.bf16.mxu0 0
      %384 = vmatpush1.bf16.msra.mxu0 %v369
      %385 = vmatprep.subr.bf16.mxu0 0
      %386 = vmatpush1.bf16.msra.mxu0 0
      %387 = vmatprep.subr.bf16.mxu0 0
      %388 = vmatpush1.bf16.msra.mxu0 0
      %389 = vmatprep.subr.bf16.mxu0 0
      %390 = vmatpush1.bf16.msra.mxu0 0
      %391 = vmatprep.subr.bf16.mxu0 0
      %392 = vmatpush1.bf16.msra.mxu0 0
      %393 = vmatprep.subr.bf16.mxu0 0
      %394 = vmatpush1.bf16.msra.mxu0 0
      %395 = vmatprep.subr.bf16.mxu0 0
      %396 = vmatpush1.bf16.msra.mxu0 0
      %397 = vmatprep.subr.bf16.mxu0 0
      %398 = vmatpush1.bf16.msra.mxu0 0
      %399 = vmatprep.subr.bf16.mxu0 0
      %400 = vmatpush1.bf16.msra.mxu0 0
      %401 = vmatprep.subr.bf16.mxu0 0
      %402 = vmatpush1.bf16.msra.mxu0 0
      %403 = vmatprep.mubr.bf16.mxu0 0
      %404 = vmatmul.mubr.bf16.gmra.mrb[0].mxu0 %v365
      %v405 = vpop.f32.mrb[0].mxu0
      %v406 = vadd.f32 0.0, %v405
      %v407 = vpop.f32.mrb[0].mxu0
      %v408 = vpop.f32.mrb[0].mxu0
      %v409 = vadd.f32 0.0, %v408
      %v410 = vpop.f32.mrb[0].mxu0
      %411 = vdwg.mxu0
      %vm412 = vcmask 203776
      %413 = vst.msk [vmem:[%s170] sm:$0xff] %vm412, %v406
      %414 = vst.msk [vmem:[%s170 + $0x8] sm:$0xff] %vm412, %v409
      %p415 = scmp.lt.s32.totalorder %s14, 1
      %s416 = scalar_select %p415, %s14, 1
      %s417 = smul.addr %s416, 2
      %s418 = smul.addr %s417, 8
      %s419 = scalar_lea.vmem %s3, %s418
      // Predicated region
      $region33: #{cnn_lenet_forward.4} parent=31 // pred_check
        %p420 = pneg %p100
      $region34: #{cnn_lenet_forward.4} parent=31 // pred_check_branch
        %422 = sbr.rel (%p420) target = $region36
      $region35: #{cnn_lenet_forward.4} parent=31 // pred_region
        _
      $region36: #{cnn_lenet_forward.4} parent=31 // pred_fallthru
        _
    $region32: #{cnn_lenet_forward.4} parent=5 // pred_fallthru
      _
    %p423 = scmp.le.s32.totalorder 2, %s9
    // Predicated region
    $region37: #{cnn_lenet_forward.4} parent=5 // pred_check
      %p424 = pneg %p423
    $region38: #{cnn_lenet_forward.4} parent=5 // pred_check_branch
      %426 = sbr.rel (%p424) target = $region40
    $region39: #{cnn_lenet_forward.4} parent=5 // pred_region
      %s427 = ssub.s32 %s9, 2
      // Predicated region
      $region41: #{cnn_lenet_forward.4} parent=39 // pred_check
        %p428 = pneg %p106
      $region42: #{cnn_lenet_forward.4} parent=39 // pred_check_branch
        %430 = sbr.rel (%p428) target = $region44
      $region43: #{cnn_lenet_forward.4} parent=39 // pred_region
        %p431 = scmp.lt.s32.totalorder %s15, 1
        %s432 = scalar_select %p431, %s15, 1
        %s433 = smul.addr %s432, 2
        %s434 = smul.addr %s433, 8
        %s435 = scalar_lea.vmem %s3, %s434
      $region44: #{cnn_lenet_forward.4} parent=39 // pred_fallthru
        _
    $region40: #{cnn_lenet_forward.4} parent=5 // pred_fallthru
      _
  $region6: #{cnn_lenet_forward.4} parent=0 // loop_footer
    %s13 = sadd.s32 1, %s9
  $region7: #{cnn_lenet_forward.4} parent=0 // loop_footer_branch
    %8 = sbr.rel target = $region3
  $region8: #{cnn_lenet_forward.4} parent=0 // loop_exit
    _

// kernel: cnn_lenet_forward.5
$region0: #{cnn_lenet_forward.5}
  #allocation0 [shape = 'u32[]', space=smem, size = 0x4, offset = 0x4, fixed_abs, tag = 'smem constant byte address 0x4 - core index']
  #allocation1 [shape = 'u32[144,128]{1,0:T(1,128)}', space=vmem, size = 0x12000, scoped, tag = 'internal scratch']
  %s0 = inlined_call_operand.vmem [shape: bf16[2,400], index: 0, kind: input, shape index: {}]
  %s1 = inlined_call_operand.vmem [shape: bf16[120,400], index: 1, kind: input, shape index: {}]
  %s2 = inlined_call_operand.vmem [shape: bf16[84,120], index: 2, kind: input, shape index: {}]
  %s3 = inlined_call_operand.vmem [shape: bf16[128,84], index: 3, kind: input, shape index: {}]
  %s4 = inlined_call_operand.vmem [shape: f32[2,128], index: 4, kind: output, shape index: {}]
  %s5 = sld [smem:[#allocation0]]
  $region26: #{cnn_lenet_forward.5} parent=0
    _
  %s7 = ssub.s32 1, %s5
  %s8 = scalar_select 0, %s7, %s5
  // Predicated region
  $region2: #{cnn_lenet_forward.5} parent=0 // pred_check
    _
  $region3: #{cnn_lenet_forward.5} parent=0 // pred_check_branch
    %10 = sbr.rel (0) target = $region5
  $region4: #{cnn_lenet_forward.5} parent=0 // pred_region
    _
  $region5: #{cnn_lenet_forward.5} parent=0 // pred_fallthru
    _
  // Predicated region
  $region6: #{cnn_lenet_forward.5} parent=0 // pred_check
    _
  $region7: #{cnn_lenet_forward.5} parent=0 // pred_check_branch
    %12 = sbr.rel (0) target = $region9
  $region8: #{cnn_lenet_forward.5} parent=0 // pred_region
    _
  $region9: #{cnn_lenet_forward.5} parent=0 // pred_fallthru
    _
  // Predicated region
  $region10: #{cnn_lenet_forward.5} parent=0 // pred_check
    _
  $region11: #{cnn_lenet_forward.5} parent=0 // pred_check_branch
    %14 = sbr.rel (0) target = $region13
  $region12: #{cnn_lenet_forward.5} parent=0 // pred_region
    _
  $region13: #{cnn_lenet_forward.5} parent=0 // pred_fallthru
    _
  // Predicated region
  $region14: #{cnn_lenet_forward.5} parent=0 // pred_check
    _
  $region15: #{cnn_lenet_forward.5} parent=0 // pred_check_branch
    %16 = sbr.rel (0) target = $region17
  $region16: #{cnn_lenet_forward.5} parent=0 // pred_region
    _
  $region17: #{cnn_lenet_forward.5} parent=0 // pred_fallthru
    _
  %v18 = vld [vmem:[%s0] sm:$0xf]
  %v19 = vld [vmem:[%s1] sm:$0xff]
  %v20 = vld [vmem:[%s1 + $0x8] sm:$0xff]
  %v21 = vld [vmem:[%s1 + $0x10] sm:$0xff]
  %v22 = vld [vmem:[%s1 + $0x18] sm:$0xff]
  %v23 = vld [vmem:[%s1 + $0x20] sm:$0xff]
  %v24 = vld [vmem:[%s1 + $0x28] sm:$0xff]
  %v25 = vld [vmem:[%s1 + $0x30] sm:$0xff]
  %v26 = vld [vmem:[%s1 + $0x38] sm:$0xff]
  %v27 = vld [vmem:[%s1 + $0x40] sm:$0xff]
  %v28 = vld [vmem:[%s1 + $0x48] sm:$0xff]
  %v29 = vld [vmem:[%s1 + $0x50] sm:$0xff]
  %v30 = vld [vmem:[%s1 + $0x58] sm:$0xff]
  %v31 = vld [vmem:[%s1 + $0x60] sm:$0xff]
  %v32 = vld [vmem:[%s1 + $0x68] sm:$0xff]
  %v33 = vld [vmem:[%s1 + $0x70] sm:$0xff]
  %v34 = vld [vmem:[%s1 + $0x78] sm:$0xff]
  %v35 = vld [vmem:[%s1 + $0x80] sm:$0xff]
  %v36 = vld [vmem:[%s1 + $0x88] sm:$0xff]
  %v37 = vld [vmem:[%s1 + $0x90] sm:$0xff]
  %v38 = vld [vmem:[%s1 + $0x98] sm:$0xff]
  %v39 = vld [vmem:[%s1 + $0xa0] sm:$0xff]
  %v40 = vld [vmem:[%s1 + $0xa8] sm:$0xff]
  %v41 = vld [vmem:[%s1 + $0xb0] sm:$0xff]
  %v42 = vld [vmem:[%s1 + $0xb8] sm:$0xff]
  %v43 = vld [vmem:[%s1 + $0xc0] sm:$0xff]
  %v44 = vld [vmem:[%s1 + $0xc8] sm:$0xff]
  %v45 = vld [vmem:[%s1 + $0xd0] sm:$0xff]
  %v46 = vld [vmem:[%s1 + $0xd8] sm:$0xff]
  %v47 = vld [vmem:[%s1 + $0xe0] sm:$0xff]
  %v48 = vld [vmem:[%s1 + $0xe8] sm:$0xff]
  %v51 = vunpack.c.l.s4 1966171168
  %v52 = vunpack.c.0.s8 %v51
  %v53 = vlaneseq
  %v54 = vshrl.u32 %v53, 7
  %v55 = vsub.s32 %v52, %v54
  %v56 = vrot.slane %v18, %v55
  %v57 = vcombine.high %v56, %v56
  %v59 = vunpack.c.l.s4 1966171168
  %v60 = vunpack.c.0.s8 %v59
  %v61 = vlaneseq
  %v62 = vshrl.u32 %v61, 7
  %v63 = vsub.s32 %v60, %v62
  %v64 = vrot.slane %v56, %v63
  %v66 = vunpack.c.l.s4 1966171168
  %v67 = vunpack.c.0.s8 %v66
  %v68 = vlaneseq
  %v69 = vshrl.u32 %v68, 7
  %v70 = vsub.s32 %v67, %v69
  %v71 = vrot.slane %v57, %v70
  %v72 = vcombine.high %v64, %v64
  %v73 = vcombine.high %v71, %v71
  %v107 = vunpack.c.l.b16 %v19
  %v108 = vunpack.c.h.b16 %v19
  %v109 = vunpack.c.l.b16 %v20
  %v110 = vunpack.c.h.b16 %v20
  %v111 = vunpack.c.l.b16 %v21
  %v112 = vunpack.c.h.b16 %v21
  %v113 = vunpack.c.l.b16 %v22
  %v114 = vunpack.c.h.b16 %v22
  %v115 = vunpack.c.l.b16 %v23
  %v116 = vunpack.c.h.b16 %v23
  %v117 = vunpack.c.l.b16 %v24
  %v118 = vunpack.c.h.b16 %v24
  %v119 = vunpack.c.l.b16 %v25
  %v120 = vunpack.c.h.b16 %v25
  %v121 = vunpack.c.l.b16 %v26
  %v122 = vunpack.c.h.b16 %v26
  %v123 = vunpack.c.l.b16 %v27
  %v124 = vunpack.c.h.b16 %v27
  %v125 = vunpack.c.l.b16 %v28
  %v126 = vunpack.c.h.b16 %v28
  %v127 = vunpack.c.l.b16 %v29
  %v128 = vunpack.c.h.b16 %v29
  %v129 = vunpack.c.l.b16 %v30
  %v130 = vunpack.c.h.b16 %v30
  %v131 = vunpack.c.l.b16 %v31
  %v132 = vunpack.c.h.b16 %v31
  %v133 = vunpack.c.l.b16 %v32
  %v134 = vunpack.c.h.b16 %v32
  %v135 = vunpack.c.l.b16 %v33
  %v136 = vunpack.c.h.b16 %v33
  %v137 = vunpack.c.l.b16 %v34
  %v138 = vunpack.c.h.b16 %v34
  %v139 = vunpack.c.l.b16 %v35
  %v140 = vunpack.c.h.b16 %v35
  %v141 = vunpack.c.l.b16 %v36
  %v142 = vunpack.c.h.b16 %v36
  %v143 = vunpack.c.l.b16 %v37
  %v144 = vunpack.c.h.b16 %v37
  %v145 = vunpack.c.l.b16 %v38
  %v146 = vunpack.c.h.b16 %v38
  %v147 = vunpack.c.l.b16 %v39
  %v148 = vunpack.c.h.b16 %v39
  %v149 = vunpack.c.l.b16 %v40
  %v150 = vunpack.c.h.b16 %v40
  %v151 = vunpack.c.l.b16 %v41
  %v152 = vunpack.c.h.b16 %v41
  %v153 = vunpack.c.l.b16 %v42
  %v154 = vunpack.c.h.b16 %v42
  %v155 = vunpack.c.l.b16 %v43
  %v156 = vunpack.c.h.b16 %v43
  %v157 = vunpack.c.l.b16 %v44
  %v158 = vunpack.c.h.b16 %v44
  %v159 = vunpack.c.l.b16 %v45
  %v160 = vunpack.c.h.b16 %v45
  %v161 = vunpack.c.l.b16 %v46
  %v162 = vunpack.c.h.b16 %v46
  %v163 = vunpack.c.l.b16 %v47
  %v164 = vunpack.c.h.b16 %v47
  %v165 = vunpack.c.l.b16 %v48
  %v166 = vunpack.c.h.b16 %v48
  %v167 = vpack.c.b16 %v111, %v107
  %v168 = vpack.c.b16 %v112, %v108
  %v169 = vpack.c.b16 %v113, %v109
  %v170 = vpack.c.b16 %v114, %v110
  %v171 = vpack.c.b16 %v119, %v115
  %v172 = vpack.c.b16 %v120, %v116
  %v173 = vpack.c.b16 %v121, %v117
  %v174 = vpack.c.b16 %v122, %v118
  %v175 = vpack.c.b16 %v127, %v123
  %v176 = vpack.c.b16 %v128, %v124
  %v177 = vpack.c.b16 %v129, %v125
  %v178 = vpack.c.b16 %v130, %v126
  %v179 = vpack.c.b16 %v135, %v131
  %v180 = vpack.c.b16 %v136, %v132
  %v181 = vpack.c.b16 %v137, %v133
  %v182 = vpack.c.b16 %v138, %v134
  %v183 = vpack.c.b16 %v143, %v139
  %v184 = vpack.c.b16 %v144, %v140
  %v185 = vpack.c.b16 %v145, %v141
  %v186 = vpack.c.b16 %v146, %v142
  %v187 = vpack.c.b16 %v151, %v147
  %v188 = vpack.c.b16 %v152, %v148
  %v189 = vpack.c.b16 %v153, %v149
  %v190 = vpack.c.b16 %v154, %v150
  %v191 = vpack.c.b16 %v159, %v155
  %v192 = vpack.c.b16 %v160, %v156
  %v193 = vpack.c.b16 %v161, %v157
  %v194 = vpack.c.b16 %v162, %v158
  %v195 = vpack.c.b16 %v163, %v163
  %v196 = vpack.c.b16 %v164, %v164
  %v197 = vpack.c.b16 %v165, %v165
  %v198 = vpack.c.b16 %v166, %v166
  %vm223 = vcmask 130048
  %v225 = vsel %vm223, %v73, 0
  %v228 = vsel %vm223, %v170, 0
  %v231 = vsel %vm223, %v174, 0
  %v234 = vsel %vm223, %v178, 0
  %v237 = vsel %vm223, %v182, 0
  %v240 = vsel %vm223, %v186, 0
  %v243 = vsel %vm223, %v190, 0
  %v246 = vsel %vm223, %v194, 0
  %v249 = vsel %vm223, %v198, 0
  %251 = vmatprep.subr.bf16.mxu0 %v168
  %252 = vmatpush1.bf16.xpose.msra.mxu0 %v167
  %253 = vmatprep.subr.bf16.mxu0 %v172
  %254 = vmatpush1.bf16.xpose.msra.mxu0 %v171
  %255 = vmatprep.subr.bf16.mxu0 %v176
  %256 = vmatpush1.bf16.xpose.msra.mxu0 %v175
  %257 = vmatprep.subr.bf16.mxu0 %v180
  %258 = vmatpush1.bf16.xpose.msra.mxu0 %v179
  %259 = vmatprep.subr.bf16.mxu0 %v184
  %260 = vmatpush1.bf16.xpose.msra.mxu0 %v183
  %261 = vmatprep.subr.bf16.mxu0 %v188
  %262 = vmatpush1.bf16.xpose.msra.mxu0 %v187
  %263 = vmatprep.subr.bf16.mxu0 %v192
  %264 = vmatpush1.bf16.xpose.msra.mxu0 %v191
  %265 = vmatprep.subr.bf16.mxu0 %v196
  %266 = vmatpush1.bf16.xpose.msra.mxu0 %v195
  %267 = vmatprep.subr.bf16.mxu0 0
  %268 = vmatpush1.bf16.xpose.msra.mxu0 0
  %269 = vmatprep.subr.bf16.mxu0 0
  %270 = vmatpush1.bf16.xpose.msra.mxu0 0
  %271 = vmatprep.subr.bf16.mxu0 0
  %272 = vmatpush1.bf16.xpose.msra.mxu0 0
  %273 = vmatprep.subr.bf16.mxu0 0
  %274 = vmatpush1.bf16.xpose.msra.mxu0 0
  %275 = vmatprep.subr.bf16.mxu0 0
  %276 = vmatpush1.bf16.xpose.msra.mxu0 0
  %277 = vmatprep.subr.bf16.mxu0 0
  %278 = vmatpush1.bf16.xpose.msra.mxu0 0
  %279 = vmatprep.subr.bf16.mxu0 0
  %280 = vmatpush1.bf16.xpose.msra.mxu0 0
  %281 = vmatprep.subr.bf16.mxu0 0
  %282 = vmatpush1.bf16.xpose.msra.mxu0 0
  %283 = vmatprep.mubr.bf16.mxu0 %v71
  %284 = vmatmul.mubr.bf16.gmra.mrb[0].mxu0 %v64
  %v285 = vpop.f32.mrb[0].mxu0
  %v286 = vadd.f32 0.0, %v285
  %v287 = vpop.f32.mrb[0].mxu0
  %v288 = vpop.f32.mrb[0].mxu0
  %v289 = vpop.f32.mrb[0].mxu0
  %290 = vdwg.mxu0
  %291 = vmatprep.subr.bf16.mxu0 %v228
  %292 = vmatpush1.bf16.xpose.msra.mxu0 %v169
  %293 = vmatprep.subr.bf16.mxu0 %v231
  %294 = vmatpush1.bf16.xpose.msra.mxu0 %v173
  %295 = vmatprep.subr.bf16.mxu0 %v234
  %296 = vmatpush1.bf16.xpose.msra.mxu0 %v177
  %297 = vmatprep.subr.bf16.mxu0 %v237
  %298 = vmatpush1.bf16.xpose.msra.mxu0 %v181
  %299 = vmatprep.subr.bf16.mxu0 %v240
  %300 = vmatpush1.bf16.xpose.msra.mxu0 %v185
  %301 = vmatprep.subr.bf16.mxu0 %v243
  %302 = vmatpush1.bf16.xpose.msra.mxu0 %v189
  %303 = vmatprep.subr.bf16.mxu0 %v246
  %304 = vmatpush1.bf16.xpose.msra.mxu0 %v193
  %305 = vmatprep.subr.bf16.mxu0 %v249
  %306 = vmatpush1.bf16.xpose.msra.mxu0 %v197
  %307 = vmatprep.subr.bf16.mxu0 0
  %308 = vmatpush1.bf16.xpose.msra.mxu0 0
  %309 = vmatprep.subr.bf16.mxu0 0
  %310 = vmatpush1.bf16.xpose.msra.mxu0 0
  %311 = vmatprep.subr.bf16.mxu0 0
  %312 = vmatpush1.bf16.xpose.msra.mxu0 0
  %313 = vmatprep.subr.bf16.mxu0 0
  %314 = vmatpush1.bf16.xpose.msra.mxu0 0
  %315 = vmatprep.subr.bf16.mxu0 0
  %316 = vmatpush1.bf16.xpose.msra.mxu0 0
  %317 = vmatprep.subr.bf16.mxu0 0
  %318 = vmatpush1.bf16.xpose.msra.mxu0 0
  %319 = vmatprep.subr.bf16.mxu0 0
  %320 = vmatpush1.bf16.xpose.msra.mxu0 0
  %321 = vmatprep.subr.bf16.mxu0 0
  %322 = vmatpush1.bf16.xpose.msra.mxu0 0
  %323 = vmatprep.mubr.bf16.mxu0 %v225
  %324 = vmatmul.mubr.bf16.gmra.mrb[0].mxu0 %v72
  %v325 = vpop.f32.mrb[0].mxu0
  %v326 = vadd.f32 %v286, %v325
  %v327 = vpop.f32.mrb[0].mxu0
  %v328 = vpop.f32.mrb[0].mxu0
  %v329 = vpop.f32.mrb[0].mxu0
  %330 = vdwg.mxu0
  %v331 = vmax.f32 %v326, 0.0
  %v332 = vpack.c.bf16 %v331, %v331
  %v333 = vld [vmem:[%s2] sm:$0xf]
  %v334 = vld [vmem:[%s2 + $0x4] sm:$0xf]
  %v335 = vld [vmem:[%s2 + $0x8] sm:$0xf]
  %v336 = vld [vmem:[%s2 + $0xc] sm:$0xf]
  %v337 = vld [vmem:[%s2 + $0x10] sm:$0xf]
  %v338 = vld [vmem:[%s2 + $0x14] sm:$0xf]
  %v339 = vld [vmem:[%s2 + $0x18] sm:$0xf]
  %v340 = vld [vmem:[%s2 + $0x1c] sm:$0xf]
  %v341 = vld [vmem:[%s2 + $0x20] sm:$0xf]
  %v342 = vld [vmem:[%s2 + $0x24] sm:$0xf]
  %v343 = vld [vmem:[%s2 + $0x28] sm:$0x3]
  %v355 = vunpack.c.l.b16 %v333
  %v356 = vunpack.c.l.b16 %v334
  %v357 = vunpack.c.l.b16 %v335
  %v358 = vunpack.c.l.b16 %v336
  %v359 = vunpack.c.l.b16 %v337
  %v360 = vunpack.c.l.b16 %v338
  %v361 = vunpack.c.l.b16 %v339
  %v362 = vunpack.c.l.b16 %v340
  %v363 = vunpack.c.l.b16 %v341
  %v364 = vunpack.c.l.b16 %v342
  %v365 = vunpack.c.l.b16 %v343
  %v366 = vpack.c.b16 %v356, %v355
  %v367 = vpack.c.b16 %v358, %v357
  %v368 = vpack.c.b16 %v360, %v359
  %v369 = vpack.c.b16 %v362, %v361
  %v370 = vpack.c.b16 %v364, %v363
  %v371 = vpack.c.b16 %v365, %v365
  %vm372 = vcmask 982016
  %v374 = vsel %vm372, %v332, 0
  %v377 = vsel %vm372, %v366, 0
  %v380 = vsel %vm372, %v367, 0
  %v383 = vsel %vm372, %v368, 0
  %v386 = vsel %vm372, %v369, 0
  %v389 = vsel %vm372, %v370, 0
  %v392 = vsel %vm372, %v371, 0
  %394 = vmatprep.subr.bf16.mxu0 0
  %395 = vmatpush1.bf16.xpose.msra.mxu0 %v377
  %396 = vmatprep.subr.bf16.mxu0 0
  %397 = vmatpush1.bf16.xpose.msra.mxu0 %v380
  %398 = vmatprep.subr.bf16.mxu0 0
  %399 = vmatpush1.bf16.xpose.msra.mxu0 %v383
  %400 = vmatprep.subr.bf16.mxu0 0
  %401 = vmatpush1.bf16.xpose.msra.mxu0 %v386
  %402 = vmatprep.subr.bf16.mxu0 0
  %403 = vmatpush1.bf16.xpose.msra.mxu0 %v389
  %404 = vmatprep.subr.bf16.mxu0 0
  %405 = vmatpush1.bf16.xpose.msra.mxu0 %v392
  %406 = vmatprep.subr.bf16.mxu0 0
  %407 = vmatpush1.bf16.xpose.msra.mxu0 0
  %408 = vmatprep.subr.bf16.mxu0 0
  %409 = vmatpush1.bf16.xpose.msra.mxu0 0
  %410 = vmatprep.subr.bf16.mxu0 0
  %411 = vmatpush1.bf16.xpose.msra.mxu0 0
  %412 = vmatprep.subr.bf16.mxu0 0
  %413 = vmatpush1.bf16.xpose.msra.mxu0 0
  %414 = vmatprep.subr.bf16.mxu0 0
  %415 = vmatpush1.bf16.xpose.msra.mxu0 0
  %416 = vmatprep.subr.bf16.mxu0 0
  %417 = vmatpush1.bf16.xpose.msra.mxu0 0
  %418 = vmatprep.subr.bf16.mxu0 0
  %419 = vmatpush1.bf16.xpose.msra.mxu0 0
  %420 = vmatprep.subr.bf16.mxu0 0
  %421 = vmatpush1.bf16.xpose.msra.mxu0 0
  %422 = vmatprep.subr.bf16.mxu0 0
  %423 = vmatpush1.bf16.xpose.msra.mxu0 0
  %424 = vmatprep.subr.bf16.mxu0 0
  %425 = vmatpush1.bf16.xpose.msra.mxu0 0
  %426 = vmatprep.mubr.bf16.mxu0 0
  %427 = vmatmul.mubr.bf16.gmra.mrb[0].mxu0 %v374
  %v428 = vpop.f32.mrb[0].mxu0
  %v429 = vadd.f32 0.0, %v428
  %v430 = vpop.f32.mrb[0].mxu0
  %v431 = vpop.f32.mrb[0].mxu0
  %v432 = vpop.f32.mrb[0].mxu0
  %433 = vdwg.mxu0
  %v434 = vmax.f32 %v429, 0.0
  %v435 = vpack.c.bf16 %v434, %v434
  %v436 = vld [vmem:[%s3] sm:$0xf]
  %v437 = vld [vmem:[%s3 + $0x4] sm:$0xf]
  %v438 = vld [vmem:[%s3 + $0x8] sm:$0xf]
  %v439 = vld [vmem:[%s3 + $0xc] sm:$0xf]
  %v440 = vld [vmem:[%s3 + $0x10] sm:$0xf]
  %v441 = vld [vmem:[%s3 + $0x14] sm:$0xf]
  %v442 = vld [vmem:[%s3 + $0x18] sm:$0xf]
  %v443 = vld [vmem:[%s3 + $0x1c] sm:$0xf]
  %v444 = vld [vmem:[%s3 + $0x20] sm:$0xf]
  %v445 = vld [vmem:[%s3 + $0x24] sm:$0xf]
  %v446 = vld [vmem:[%s3 + $0x28] sm:$0xf]
  %v447 = vld [vmem:[%s3 + $0x2c] sm:$0xf]
  %v448 = vld [vmem:[%s3 + $0x30] sm:$0xf]
  %v449 = vld [vmem:[%s3 + $0x34] sm:$0xf]
  %v450 = vld [vmem:[%s3 + $0x38] sm:$0xf]
  %v451 = vld [vmem:[%s3 + $0x3c] sm:$0xf]
  %v468 = vunpack.c.l.b16 %v436
  %v469 = vunpack.c.l.b16 %v437
  %v470 = vunpack.c.l.b16 %v438
  %v471 = vunpack.c.l.b16 %v439
  %v472 = vunpack.c.l.b16 %v440
  %v473 = vunpack.c.l.b16 %v441
  %v474 = vunpack.c.l.b16 %v442
  %v475 = vunpack.c.l.b16 %v443
  %v476 = vunpack.c.l.b16 %v444
  %v477 = vunpack.c.l.b16 %v445
  %v478 = vunpack.c.l.b16 %v446
  %v479 = vunpack.c.l.b16 %v447
  %v480 = vunpack.c.l.b16 %v448
  %v481 = vunpack.c.l.b16 %v449
  %v482 = vunpack.c.l.b16 %v450
  %v483 = vunpack.c.l.b16 %v451
  %v484 = vpack.c.b16 %v469, %v468
  %v485 = vpack.c.b16 %v471, %v470
  %v486 = vpack.c.b16 %v473, %v472
  %v487 = vpack.c.b16 %v475, %v474
  %v488 = vpack.c.b16 %v477, %v476
  %v489 = vpack.c.b16 %v479, %v478
  %v490 = vpack.c.b16 %v481, %v480
  %v491 = vpack.c.b16 %v483, %v482
  %vm492 = vcmask 687104
  %v494 = vsel %vm492, %v435, 0
  %v497 = vsel %vm492, %v484, 0
  %v500 = vsel %vm492, %v485, 0
  %v503 = vsel %vm492, %v486, 0
  %v506 = vsel %vm492, %v487, 0
  %v509 = vsel %vm492, %v488, 0
  %v512 = vsel %vm492, %v489, 0
  %v515 = vsel %vm492, %v490, 0
  %v518 = vsel %vm492, %v491, 0
  %520 = vmatprep.subr.bf16.mxu0 0
  %521 = vmatpush1.bf16.xpose.msra.mxu0 %v497
  %522 = vmatprep.subr.bf16.mxu0 0
  %523 = vmatpush1.bf16.xpose.msra.mxu0 %v500
  %524 = vmatprep.subr.bf16.mxu0 0
  %525 = vmatpush1.bf16.xpose.msra.mxu0 %v503
  %526 = vmatprep.subr.bf16.mxu0 0
  %527 = vmatpush1.bf16.xpose.msra.mxu0 %v506
  %528 = vmatprep.subr.bf16.mxu0 0
  %529 = vmatpush1.bf16.xpose.msra.mxu0 %v509
  %530 = vmatprep.subr.bf16.mxu0 0
  %531 = vmatpush1.bf16.xpose.msra.mxu0 %v512
  %532 = vmatprep.subr.bf16.mxu0 0
  %533 = vmatpush1.bf16.xpose.msra.mxu0 %v515
  %534 = vmatprep.subr.bf16.mxu0 0
  %535 = vmatpush1.bf16.xpose.msra.mxu0 %v518
  %536 = vmatprep.subr.bf16.mxu0 0
  %537 = vmatpush1.bf16.xpose.msra.mxu0 0
  %538 = vmatprep.subr.bf16.mxu0 0
  %539 = vmatpush1.bf16.xpose.msra.mxu0 0
  %540 = vmatprep.subr.bf16.mxu0 0
  %541 = vmatpush1.bf16.xpose.msra.mxu0 0
  %542 = vmatprep.subr.bf16.mxu0 0
  %543 = vmatpush1.bf16.xpose.msra.mxu0 0
  %544 = vmatprep.subr.bf16.mxu0 0
  %545 = vmatpush1.bf16.xpose.msra.mxu0 0
  %546 = vmatprep.subr.bf16.mxu0 0
  %547 = vmatpush1.bf16.xpose.msra.mxu0 0
  %548 = vmatprep.subr.bf16.mxu0 0
  %549 = vmatpush1.bf16.xpose.msra.mxu0 0
  %550 = vmatprep.subr.bf16.mxu0 0
  %551 = vmatpush1.bf16.xpose.msra.mxu0 0
  %552 = vmatprep.mubr.bf16.mxu0 0
  %553 = vmatmul.mubr.bf16.gmra.mrb[0].mxu0 %v494
  %v554 = vpop.f32.mrb[0].mxu0
  %v555 = vadd.f32 0.0, %v554
  %v556 = vpop.f32.mrb[0].mxu0
  %v557 = vpop.f32.mrb[0].mxu0
  %v558 = vpop.f32.mrb[0].mxu0
  %559 = vdwg.mxu0
  %560 = vst [vmem:[%s4] sm:$0x3] %v555
  // Predicated region
  $region18: #{cnn_lenet_forward.5} parent=0 // pred_check
    _
  $region19: #{cnn_lenet_forward.5} parent=0 // pred_check_branch
    %562 = sbr.rel (0) target = $region21
  $region20: #{cnn_lenet_forward.5} parent=0 // pred_region
    _
  $region21: #{cnn_lenet_forward.5} parent=0 // pred_fallthru
    _
  // Predicated region
  $region22: #{cnn_lenet_forward.5} parent=0 // pred_check
    _
  $region23: #{cnn_lenet_forward.5} parent=0 // pred_check_branch
    %564 = sbr.rel (0) target = $region25
  $region24: #{cnn_lenet_forward.5} parent=0 // pred_region
    _
  $region25: #{cnn_lenet_forward.5} parent=0 // pred_fallthru
    _

</llo_original>
